<compile_context>
chip_gen: v5e
topology: v5e:2x2
jax: 0.10.0
libtpu: 0.0.40
codegen_flags: <defaults>
</compile_context>

<pallas_src>
import jax
import jax.numpy as jnp
from jax.experimental import pallas as pl
from jax.experimental.pallas import tpu as pltpu


# ----------------------------------------------------------------------------
# Fused Pallas kernel: K-tiled start_proj + simpleMLP, two outputs.
# ----------------------------------------------------------------------------
def _fused_kernel(fmri_ref, sw_ref, sb_ref,                 # start_proj inputs
                  img_ref, w1_ref, b1_ref, w2_ref, b2_ref,  # simpleMLP inputs
                  x_ref, y_ref,                             # outputs
                  acc_ref):                                 # f32 accumulator
    k = pl.program_id(0)

    @pl.when(k == 0)
    def _init_and_mlp():
        # Fold the start_proj bias into the accumulator init (saves the
        # broadcast-add in the epilogue).
        acc_ref[...] = jnp.broadcast_to(sb_ref[...], acc_ref.shape)
        # simpleMLP: fc2(relu(fc1(img))) — independent of the K loop; computed
        # once while the remaining start_proj weight tiles stream in.
        h = jnp.dot(img_ref[...], w1_ref[...],
                    preferred_element_type=jnp.float32) + b1_ref[...]
        h = jnp.maximum(h, 0.0)
        y = jnp.dot(h.astype(w2_ref.dtype), w2_ref[...],
                    preferred_element_type=jnp.float32) + b2_ref[...]
        y_ref[...] = y.astype(y_ref.dtype)

    # start_proj partial product for this K tile (bf16 inputs, f32 accumulate).
    acc_ref[...] += jnp.dot(fmri_ref[...], sw_ref[...],
                            preferred_element_type=jnp.float32)

    @pl.when(k == pl.num_programs(0) - 1)
    def _finalize():
        x_ref[...] = acc_ref[...].astype(x_ref.dtype)


def _round_up(v, m):
    return ((v + m - 1) // m) * m


def _pad2d(x, rows, cols, dtype):
    x = x.astype(dtype)
    if x.shape == (rows, cols):
        return x
    return jnp.zeros((rows, cols), dtype).at[:x.shape[0], :x.shape[1]].set(x)


def fmri_gm_fused(params, fmri, img, *, tk=2048):
    """Fused start_proj(fmri) and img_encoder(img) in one pallas_call.

    fmri: (N, fmri_dim) f32, img: (N, 512) f32.
    Returns (x, y) both (N, 512) f32.
    """
    N, din = fmri.shape
    assert img.shape == (N, 512)
    f32, bf16 = jnp.float32, jnp.bfloat16

    # Row (sublane) padding and K-tile sizing: blocks must satisfy the (8, 128)
    # divisibility rule; zero padding does not change the dot products.
    n_pad = _round_up(N, 8)
    tk_eff = min(tk, _round_up(din, 128))
    din_pad = _round_up(din, tk_eff)
    kt = din_pad // tk_eff

    # bf16 activations/weights, f32 biases, zero padding only when needed.
    fmri_p = _pad2d(fmri, n_pad, din_pad, bf16)
    img_p = _pad2d(img, n_pad, 512, bf16)
    sw = _pad2d(params["start_w"], din_pad, 512, bf16)
    sb = params["start_b"].reshape(1, 512).astype(f32)
    w1 = params["fc1_w"].astype(bf16)
    b1 = params["fc1_b"].reshape(1, 256).astype(f32)
    w2 = params["fc2_w"].astype(bf16)
    b2 = params["fc2_b"].reshape(1, 512).astype(f32)

    flops = 2 * n_pad * (din_pad * 512 + 512 * 256 + 256 * 512)
    bytes_accessed = (
        2 * (fmri_p.size + img_p.size + sw.size + w1.size + w2.size)  # bf16 in
        + 4 * (sb.size + b1.size + b2.size)                           # f32 in
        + 4 * 2 * n_pad * 512                                         # f32 out
    )

    x_p, y_p = pl.pallas_call(
        _fused_kernel,
        out_shape=(
            jax.ShapeDtypeStruct((n_pad, 512), f32),
            jax.ShapeDtypeStruct((n_pad, 512), f32),
        ),
        grid_spec=pltpu.PrefetchScalarGridSpec(
            num_scalar_prefetch=0,
            grid=(kt,),
            in_specs=[
                pl.BlockSpec((n_pad, tk_eff), lambda k: (0, k)),   # fmri tile
                pl.BlockSpec((tk_eff, 512), lambda k: (k, 0)),     # start_w tile
                pl.BlockSpec((1, 512), lambda k: (0, 0)),          # start_b
                pl.BlockSpec((n_pad, 512), lambda k: (0, 0)),      # img
                pl.BlockSpec((512, 256), lambda k: (0, 0)),        # fc1_w
                pl.BlockSpec((1, 256), lambda k: (0, 0)),          # fc1_b
                pl.BlockSpec((256, 512), lambda k: (0, 0)),        # fc2_w
                pl.BlockSpec((1, 512), lambda k: (0, 0)),          # fc2_b
            ],
            out_specs=(
                pl.BlockSpec((n_pad, 512), lambda k: (0, 0)),      # x (resident)
                pl.BlockSpec((n_pad, 512), lambda k: (0, 0)),      # y (resident)
            ),
            scratch_shapes=[pltpu.VMEM((n_pad, 512), f32)],
        ),
        compiler_params=pltpu.CompilerParams(
            dimension_semantics=("arbitrary",),   # K is a reduction axis
        ),
        cost_estimate=pl.CostEstimate(
            flops=flops, transcendentals=0, bytes_accessed=bytes_accessed),
    )(fmri_p, sw, sb, img_p, w1, b1, w2, b2)

    return x_p[:N], y_p[:N]


# ----------------------------------------------------------------------------
# Parameter construction (deterministic, PyTorch-Linear-style uniform init)
# ----------------------------------------------------------------------------
def _init_linear(key, fan_in, fan_out):
    kw, kb = jax.random.split(key)
    bound = 1.0 / jnp.sqrt(float(fan_in))
    # stored already transposed: (fan_in, fan_out)
    w_t = jax.random.uniform(kw, (fan_in, fan_out), jnp.float32, -bound, bound)
    b = jax.random.uniform(kb, (fan_out,), jnp.float32, -bound, bound)
    return w_t, b


def init_fmri_gm_params(key, fmri_dim):
    k_start, k_fc1, k_fc2 = jax.random.split(key, 3)
    start_w, start_b = _init_linear(k_start, fmri_dim, 512)     # start_proj
    fc1_w, fc1_b = _init_linear(k_fc1, 512, 256)                # img_encoder.fc1
    fc2_w, fc2_b = _init_linear(k_fc2, 256, 512)                # img_encoder.fc2
    return dict(start_w=start_w, start_b=start_b,
                fc1_w=fc1_w, fc1_b=fc1_b, fc2_w=fc2_w, fc2_b=fc2_b)


# ----------------------------------------------------------------------------
# fMRIGM.forward, topk == 0 path
# ----------------------------------------------------------------------------
def fmri_gm_forward(params, fmri, img, *, tk=2048):
    # x = self.start_proj(fmri); y = self.img_encoder(img)  — one fused kernel.
    x, y = fmri_gm_fused(params, fmri, img, tk=tk)
    # TODO(synk): x = self.fmri_encoder(x) and x, y = self.gnn(...) — class
    # definitions not provided; identity pass-through.
    # topk == 0 branch: return (x.squeeze(), y.squeeze())
    return jnp.squeeze(x), jnp.squeeze(y)


# ----------------------------------------------------------------------------
if __name__ == "__main__":
    key = jax.random.PRNGKey(0)
    k_param, k_fmri, k_img = jax.random.split(key, 3)

    N = 8            # number of fMRI / image tokens (batch of rows)
    FMRI_DIM = 384   # fmri_dim (small; real runs use ~15k voxels)

    params = init_fmri_gm_params(k_param, FMRI_DIM)
    fmri = jax.random.normal(k_fmri, (N, FMRI_DIM), jnp.float32)
    img = jax.random.normal(k_img, (N, 512), jnp.float32)

    # tk=128 here so the K-tiled accumulator path (grid of 3) is exercised even
    # at this toy fmri_dim; production default is tk=2048 (v6e can use 4096).
    x_out, y_out = fmri_gm_forward(params, fmri, img, tk=128)
    jax.block_until_ready((x_out, y_out))

    # sanity check against plain-JAX f32 reference (bf16 kernel -> loose tol)
    x_ref = fmri @ params["start_w"] + params["start_b"]
    h_ref = jnp.maximum(img @ params["fc1_w"] + params["fc1_b"], 0.0)
    y_ref = h_ref @ params["fc2_w"] + params["fc2_b"]
    assert jnp.allclose(x_out, x_ref, atol=5e-2, rtol=5e-2)
    assert jnp.allclose(y_out, y_ref, atol=5e-2, rtol=5e-2)

    print("KERNEL_OK")
</pallas_src>

<mosaic_0001>
module attributes {stable_mosaic.version = 11 : i64} {
  func.func @_fused_kernel(%arg0: i32, %arg1: memref<8x128xbf16, #tpu.memory_space<vmem>>, %arg2: memref<128x512xbf16, #tpu.memory_space<vmem>>, %arg3: memref<1x512xf32, #tpu.memory_space<vmem>>, %arg4: memref<8x512xbf16, #tpu.memory_space<vmem>>, %arg5: memref<512x256xbf16, #tpu.memory_space<vmem>>, %arg6: memref<1x256xf32, #tpu.memory_space<vmem>>, %arg7: memref<256x512xbf16, #tpu.memory_space<vmem>>, %arg8: memref<1x512xf32, #tpu.memory_space<vmem>>, %arg9: memref<8x512xf32, #tpu.memory_space<vmem>>, %arg10: memref<8x512xf32, #tpu.memory_space<vmem>>, %arg11: memref<8x512xf32, #tpu.memory_space<vmem>>) attributes {dimension_semantics = [#tpu.dimension_semantics<arbitrary>], iteration_bounds = array<i64: 3>, scalar_prefetch = 0 : i64, scratch_operands = 1 : i64, tpu.core_type = #tpu.core_type<tc>, window_params = [{transform_indices = @transform_0, window_bounds = array<i64: 8, 128>}, {transform_indices = @transform_1, window_bounds = array<i64: 128, 512>}, {pipeline_mode = #tpu.pipeline_mode<synchronous>, transform_indices = @transform_2, window_bounds = array<i64: 1, 512>}, {pipeline_mode = #tpu.pipeline_mode<synchronous>, transform_indices = @transform_3, window_bounds = array<i64: 8, 512>}, {pipeline_mode = #tpu.pipeline_mode<synchronous>, transform_indices = @transform_4, window_bounds = array<i64: 512, 256>}, {pipeline_mode = #tpu.pipeline_mode<synchronous>, transform_indices = @transform_5, window_bounds = array<i64: 1, 256>}, {pipeline_mode = #tpu.pipeline_mode<synchronous>, transform_indices = @transform_6, window_bounds = array<i64: 256, 512>}, {pipeline_mode = #tpu.pipeline_mode<synchronous>, transform_indices = @transform_7, window_bounds = array<i64: 1, 512>}, {pipeline_mode = #tpu.pipeline_mode<synchronous>, transform_indices = @transform_8, window_bounds = array<i64: 8, 512>}, {pipeline_mode = #tpu.pipeline_mode<synchronous>, transform_indices = @transform_9, window_bounds = array<i64: 8, 512>}]} {
    %c0_i32 = arith.constant 0 : i32
    %0 = arith.cmpi eq, %arg0, %c0_i32 : i32
    %1 = arith.extui %0 : i1 to i32
    %c0_i32_0 = arith.constant 0 : i32
    %2 = arith.cmpi ne, %1, %c0_i32_0 : i32
    scf.if %2 {
      %c0_9 = arith.constant 0 : index
      %c0_10 = arith.constant 0 : index
      %12 = vector.load %arg3[%c0_9, %c0_10] : memref<1x512xf32, #tpu.memory_space<vmem>>, vector<1x512xf32>
      %13 = vector.shape_cast %12 : vector<1x512xf32> to vector<1x512xf32>
      %14 = vector.broadcast %13 : vector<1x512xf32> to vector<8x512xf32>
      %c0_11 = arith.constant 0 : index
      %c0_12 = arith.constant 0 : index
      %15 = vector.load %arg11[%c0_11, %c0_12] : memref<8x512xf32, #tpu.memory_space<vmem>>, vector<8x512xf32>
      tpu.vector_store %arg11[%c0_11, %c0_12], %14 {strides = array<i32>} : memref<8x512xf32, #tpu.memory_space<vmem>>, vector<8x512xf32>,
      %c0_13 = arith.constant 0 : index
      %c0_14 = arith.constant 0 : index
      %16 = vector.load %arg4[%c0_13, %c0_14] : memref<8x512xbf16, #tpu.memory_space<vmem>>, vector<8x512xbf16>
      %c0_15 = arith.constant 0 : index
      %c0_16 = arith.constant 0 : index
      %17 = vector.load %arg5[%c0_15, %c0_16] : memref<512x256xbf16, #tpu.memory_space<vmem>>, vector<512x256xbf16>
      %cst_17 = arith.constant dense<0.000000e+00> : vector<8x256xf32>
      %18 = tpu.matmul %16, %17, %cst_17 {dimension_numbers = #tpu.dot_dimension_numbers<[1], [0], [0], [1], [0, 0, 1, 1], [], []>} : vector<8x512xbf16>, vector<512x256xbf16>, vector<8x256xf32> -> vector<8x256xf32>
      %c0_18 = arith.constant 0 : index
      %c0_19 = arith.constant 0 : index
      %19 = vector.load %arg6[%c0_18, %c0_19] : memref<1x256xf32, #tpu.memory_space<vmem>>, vector<1x256xf32>
      %20 = vector.broadcast %19 : vector<1x256xf32> to vector<8x256xf32>
      %21 = arith.addf %18, %20 : vector<8x256xf32>
      %cst_20 = arith.constant 0.000000e+00 : f32
      %22 = vector.broadcast %cst_20 : f32 to vector<8x256xf32>
      %23 = arith.maximumf %21, %22 : vector<8x256xf32>
      %24 = arith.truncf %23 : vector<8x256xf32> to vector<8x256xbf16>
      %c0_21 = arith.constant 0 : index
      %c0_22 = arith.constant 0 : index
      %25 = vector.load %arg7[%c0_21, %c0_22] : memref<256x512xbf16, #tpu.memory_space<vmem>>, vector<256x512xbf16>
      %cst_23 = arith.constant dense<0.000000e+00> : vector<8x512xf32>
      %26 = tpu.matmul %24, %25, %cst_23 {dimension_numbers = #tpu.dot_dimension_numbers<[1], [0], [0], [1], [0, 0, 1, 1], [], []>} : vector<8x256xbf16>, vector<256x512xbf16>, vector<8x512xf32> -> vector<8x512xf32>
      %c0_24 = arith.constant 0 : index
      %c0_25 = arith.constant 0 : index
      %27 = vector.load %arg8[%c0_24, %c0_25] : memref<1x512xf32, #tpu.memory_space<vmem>>, vector<1x512xf32>
      %28 = vector.broadcast %27 : vector<1x512xf32> to vector<8x512xf32>
      %29 = arith.addf %26, %28 : vector<8x512xf32>
      %c0_26 = arith.constant 0 : index
      %c0_27 = arith.constant 0 : index
      %30 = vector.load %arg10[%c0_26, %c0_27] : memref<8x512xf32, #tpu.memory_space<vmem>>, vector<8x512xf32>
      tpu.vector_store %arg10[%c0_26, %c0_27], %29 {strides = array<i32>} : memref<8x512xf32, #tpu.memory_space<vmem>>, vector<8x512xf32>,
    } else {
    }
    %c0 = arith.constant 0 : index
    %c0_1 = arith.constant 0 : index
    %3 = vector.load %arg11[%c0, %c0_1] : memref<8x512xf32, #tpu.memory_space<vmem>>, vector<8x512xf32>
    %c0_2 = arith.constant 0 : index
    %c0_3 = arith.constant 0 : index
    %4 = vector.load %arg1[%c0_2, %c0_3] : memref<8x128xbf16, #tpu.memory_space<vmem>>, vector<8x128xbf16>
    %c0_4 = arith.constant 0 : index
    %c0_5 = arith.constant 0 : index
    %5 = vector.load %arg2[%c0_4, %c0_5] : memref<128x512xbf16, #tpu.memory_space<vmem>>, vector<128x512xbf16>
    %cst = arith.constant dense<0.000000e+00> : vector<8x512xf32>
    %6 = tpu.matmul %4, %5, %cst {dimension_numbers = #tpu.dot_dimension_numbers<[1], [0], [0], [1], [0, 0, 1, 1], [], []>} : vector<8x128xbf16>, vector<128x512xbf16>, vector<8x512xf32> -> vector<8x512xf32>
    %7 = arith.addf %3, %6 : vector<8x512xf32>
    %c0_6 = arith.constant 0 : index
    %c0_7 = arith.constant 0 : index
    %8 = vector.load %arg11[%c0_6, %c0_7] : memref<8x512xf32, #tpu.memory_space<vmem>>, vector<8x512xf32>
    tpu.vector_store %arg11[%c0_6, %c0_7], %7 {strides = array<i32>} : memref<8x512xf32, #tpu.memory_space<vmem>>, vector<8x512xf32>,
    %c2_i32 = arith.constant 2 : i32
    %9 = arith.cmpi eq, %arg0, %c2_i32 : i32
    %10 = arith.extui %9 : i1 to i32
    %c0_i32_8 = arith.constant 0 : i32
    %11 = arith.cmpi ne, %10, %c0_i32_8 : i32
    scf.if %11 {
      %c0_9 = arith.constant 0 : index
      %c0_10 = arith.constant 0 : index
      %12 = vector.load %arg11[%c0_9, %c0_10] : memref<8x512xf32, #tpu.memory_space<vmem>>, vector<8x512xf32>
      %c0_11 = arith.constant 0 : index
      %c0_12 = arith.constant 0 : index
      %13 = vector.load %arg9[%c0_11, %c0_12] : memref<8x512xf32, #tpu.memory_space<vmem>>, vector<8x512xf32>
      tpu.vector_store %arg9[%c0_11, %c0_12], %12 {strides = array<i32>} : memref<8x512xf32, #tpu.memory_space<vmem>>, vector<8x512xf32>,
    } else {
    }
    return
  }
  func.func @transform_0(%arg0: i32) -> (i32, i32) {
    %c0_i32 = arith.constant 0 : i32
    %c0_i32_0 = arith.constant 0 : i32
    return %c0_i32, %arg0 : i32, i32
  }
  func.func @transform_1(%arg0: i32) -> (i32, i32) {
    %c0_i32 = arith.constant 0 : i32
    %c0_i32_0 = arith.constant 0 : i32
    return %arg0, %c0_i32 : i32, i32
  }
  func.func @transform_2(%arg0: i32) -> (i32, i32) {
    %c0_i32 = arith.constant 0 : i32
    %c0_i32_0 = arith.constant 0 : i32
    %c0_i32_1 = arith.constant 0 : i32
    return %c0_i32, %c0_i32_0 : i32, i32
  }
  func.func @transform_3(%arg0: i32) -> (i32, i32) {
    %c0_i32 = arith.constant 0 : i32
    %c0_i32_0 = arith.constant 0 : i32
    %c0_i32_1 = arith.constant 0 : i32
    return %c0_i32, %c0_i32_0 : i32, i32
  }
  func.func @transform_4(%arg0: i32) -> (i32, i32) {
    %c0_i32 = arith.constant 0 : i32
    %c0_i32_0 = arith.constant 0 : i32
    %c0_i32_1 = arith.constant 0 : i32
    return %c0_i32, %c0_i32_0 : i32, i32
  }
  func.func @transform_5(%arg0: i32) -> (i32, i32) {
    %c0_i32 = arith.constant 0 : i32
    %c0_i32_0 = arith.constant 0 : i32
    %c0_i32_1 = arith.constant 0 : i32
    return %c0_i32, %c0_i32_0 : i32, i32
  }
  func.func @transform_6(%arg0: i32) -> (i32, i32) {
    %c0_i32 = arith.constant 0 : i32
    %c0_i32_0 = arith.constant 0 : i32
    %c0_i32_1 = arith.constant 0 : i32
    return %c0_i32, %c0_i32_0 : i32, i32
  }
  func.func @transform_7(%arg0: i32) -> (i32, i32) {
    %c0_i32 = arith.constant 0 : i32
    %c0_i32_0 = arith.constant 0 : i32
    %c0_i32_1 = arith.constant 0 : i32
    return %c0_i32, %c0_i32_0 : i32, i32
  }
  func.func @transform_8(%arg0: i32) -> (i32, i32) {
    %c0_i32 = arith.constant 0 : i32
    %c0_i32_0 = arith.constant 0 : i32
    %c0_i32_1 = arith.constant 0 : i32
    return %c0_i32, %c0_i32_0 : i32, i32
  }
  func.func @transform_9(%arg0: i32) -> (i32, i32) {
    %c0_i32 = arith.constant 0 : i32
    %c0_i32_0 = arith.constant 0 : i32
    %c0_i32_1 = arith.constant 0 : i32
    return %c0_i32, %c0_i32_0 : i32, i32
  }
}

</mosaic_0001>

<llo_original>
// kernel: tpu_custom_call.1
$region0: #{tpu_custom_call.1}
  #allocation0 [shape = 'u32[]', space=smem, size = 0x4, offset = 0x4, fixed_abs, tag = 'smem constant byte address 0x4 - core index']
  #allocation1 [shape = 'u32[72,128]{1,0:T(1,128)}', space=vmem, size = 0x9000, scoped, tag = 'internal scratch']
  #allocation2 [shape = 'f32[8,512]{1,0:T(8,128)}', space=vmem, size = 0x4000, scoped, tag = 'scratch operand']
  %s0 = inlined_call_operand.hbm [shape: bf16[8,384], index: 0, kind: input, shape index: {}]
  %s1 = inlined_call_operand.hbm [shape: bf16[384,512], index: 1, kind: input, shape index: {}]
  %s2 = inlined_call_operand.hbm [shape: f32[1,512], index: 2, kind: input, shape index: {}]
  %s3 = inlined_call_operand.hbm [shape: bf16[8,512], index: 3, kind: input, shape index: {}]
  %s4 = inlined_call_operand.hbm [shape: bf16[512,256], index: 4, kind: input, shape index: {}]
  %s5 = inlined_call_operand.vmem [shape: f32[1,256], index: 5, kind: input, shape index: {}]
  %s6 = inlined_call_operand.hbm [shape: bf16[256,512], index: 6, kind: input, shape index: {}]
  %s7 = inlined_call_operand.vmem [shape: f32[1,512], index: 7, kind: input, shape index: {}]
  %s8 = inlined_call_operand.hbm [shape: f32[8,512], index: 8, kind: output, shape index: {0}]
  %s9 = inlined_call_operand.hbm [shape: f32[8,512], index: 9, kind: output, shape index: {1}]
  %10 = xla_tuple %s8, %s9
  %s11 = sld [smem:[#allocation0]]
  $region105: #{tpu_custom_call.1} parent=0
    _
  %s13 = ssub.s32 1, %s11
  %s14 = scalar_select 0, %s13, %s11
  $region1: #{tpu_custom_call.1} parent=0
    #allocation3 [shape = 'u8[4096]{0}', space=vmem, size = 0x1000, scoped, tag = 'input window, operand 0']
    #allocation4 [shape = 's32[2]{0}', space=sflag, size = 0x8, scoped, tag = 'scoped memory for tpu_custom_call.1']
    #allocation5 [shape = 's32[2]{0}', space=sflag, size = 0x8, scoped, tag = 'scoped memory for tpu_custom_call.1']
    #allocation6 [shape = 'u8[262144]{0}', space=vmem, size = 0x40000, scoped, tag = 'input window, operand 1']
    #allocation7 [shape = 's32[2]{0}', space=sflag, size = 0x8, scoped, tag = 'scoped memory for tpu_custom_call.1']
    #allocation8 [shape = 'u8[2048]{0}', space=vmem, size = 0x800, scoped, tag = 'input window, operand 2, single buffered']
    #allocation9 [shape = 'u8[8192]{0}', space=vmem, size = 0x2000, scoped, tag = 'input window, operand 3, single buffered']
    #allocation10 [shape = 's32[1]{0}', space=sflag, size = 0x4, scoped, tag = 'scoped memory for tpu_custom_call.1']
    #allocation11 [shape = 'u8[262144]{0}', space=vmem, size = 0x40000, scoped, tag = 'input window, operand 4, single buffered']
    #allocation12 [shape = 'u8[262144]{0}', space=vmem, size = 0x40000, scoped, tag = 'input window, operand 6, single buffered']
    #allocation13 [shape = 's32[1]{0}', space=sflag, size = 0x4, scoped, tag = 'scoped memory for tpu_custom_call.1']
    #allocation14 [shape = 'u8[16384]{0}', space=vmem, size = 0x4000, scoped, tag = 'output window, operand 0, single buffered']
    #allocation15 [shape = 'u8[16384]{0}', space=vmem, size = 0x4000, scoped, tag = 'output window, operand 1, single buffered']
    #allocation16 [shape = 's32[1]{0}', space=sflag, size = 0x4, scoped, tag = 'scoped memory for tpu_custom_call.1']
    %15 = vsyncpa [#allocation4], 0
    %s16 = scalar_lea.sflag [#allocation4], 1
    %17 = vsyncpa %s16, 0
    %18 = vsyncpa [#allocation7], 0
    %s19 = scalar_lea.sflag [#allocation7], 1
    %20 = vsyncpa %s19, 0
    %21 = vsyncpa [#allocation10], 0
    %22 = vsyncpa [#allocation13], 0
    %23 = vsyncpa [#allocation5], 0
    %24 = vsyncpa [#allocation16], 0
    loop: start=0, step=1, limit=5
    $region2: #{tpu_custom_call.1} parent=1 // loop_pre_header
      _
    $region3: #{tpu_custom_call.1} parent=1 // loop_header
      %s26 = sphi 0, %s30
      %p27 = scmp.ge.s32.totalorder %s26, 5
      %s36 = sphi 0, %s38
      %s39 = sphi 0, %s36
      %s40 = sphi 0, %s39
      %s56 = sphi 0, %s40
      %s62 = sphi 0, %s64
      %s65 = sphi 0, %s62
      %s66 = sphi 0, %s65
      %s82 = sphi 0, %s66
      %s86 = sphi 0, %s86
      %s88 = sphi 0, %s86
      %s89 = sphi 0, %s88
      %s103 = sphi 0, %s89
      %s107 = sphi 0, %s107
      %s109 = sphi 0, %s107
      %s110 = sphi 0, %s109
      %s124 = sphi 0, %s110
      %s128 = sphi 0, %s128
      %s130 = sphi 0, %s128
      %s131 = sphi 0, %s130
      %s145 = sphi 0, %s131
      %s149 = sphi 0, %s149
      %s151 = sphi 0, %s149
      %s152 = sphi 0, %s151
      %s166 = sphi 0, %s152
      %s170 = sphi 0, %s170
      %s172 = sphi 0, %s170
      %s173 = sphi 0, %s172
      %s187 = sphi 0, %s173
      %s191 = sphi 0, %s191
      %s193 = sphi 0, %s191
      %s194 = sphi 0, %s193
      %s208 = sphi 0, %s194
      %s212 = sphi 0, %s212
      %s214 = sphi 0, %s212
      %s215 = sphi 0, %s214
      %s229 = sphi 0, %s215
      %s233 = sphi 0, %s233
      %s235 = sphi 0, %s233
      %s236 = sphi 0, %s235
      %s250 = sphi 0, %s236
    $region4: #{tpu_custom_call.1} parent=1 // loop_header_branch
      %29 = sbr.rel (%p27) target = $region8
    $region5: #{tpu_custom_call.1} parent=1 // loop_body
      %s31 = ssub.s32 %s26, 1
      %s32 = ssub.s32 %s26, 2
      %s33 = sadd.s32 %s26, 1
      %s34 = ssub.s32 %s26, %s33
      %p35 = scmp.eq.s32.totalorder %s34, 0
      %s37 = sadd.s32 %s36, 1
      %s38 = scalar_select %p35, %s36, %s37
      %p41 = pneg %p35
      %p42 = scmp.eq.s32.totalorder %s26, 2
      %p43 = por %p41, %p42
      %p44 = scmp.ne.s32.totalorder %s36, %s39
      %p45 = scmp.eq.s32.totalorder %s26, 0
      %p46 = por %p44, %p45
      %p47 = scmp.ne.s32.totalorder %s36, %s39
      %p48 = scmp.eq.s32.totalorder %s31, 2
      %p49 = por %p47, %p48
      %p50 = scmp.ne.s32.totalorder %s39, %s40
      %p51 = scmp.eq.s32.totalorder %s31, 0
      %p52 = por %p50, %p51
      %p53 = scmp.ne.s32.totalorder %s39, %s40
      %p54 = scmp.eq.s32.totalorder %s32, 2
      %p55 = por %p53, %p54
      %p57 = scmp.ne.s32.totalorder %s40, %s56
      %p58 = scmp.eq.s32.totalorder %s32, 0
      %p59 = por %p57, %p58
      %s60 = ssub.s32 %s26, %s33
      %p61 = scmp.eq.s32.totalorder %s60, 0
      %s63 = sadd.s32 %s62, 1
      %s64 = scalar_select %p61, %s62, %s63
      %p67 = pneg %p61
      %p68 = scmp.eq.s32.totalorder %s26, 2
      %p69 = por %p67, %p68
      %p70 = scmp.ne.s32.totalorder %s62, %s65
      %p71 = scmp.eq.s32.totalorder %s26, 0
      %p72 = por %p70, %p71
      %p73 = scmp.ne.s32.totalorder %s62, %s65
      %p74 = scmp.eq.s32.totalorder %s31, 2
      %p75 = por %p73, %p74
      %p76 = scmp.ne.s32.totalorder %s65, %s66
      %p77 = scmp.eq.s32.totalorder %s31, 0
      %p78 = por %p76, %p77
      %p79 = scmp.ne.s32.totalorder %s65, %s66
      %p80 = scmp.eq.s32.totalorder %s32, 2
      %p81 = por %p79, %p80
      %p83 = scmp.ne.s32.totalorder %s66, %s82
      %p84 = scmp.eq.s32.totalorder %s32, 0
      %p85 = por %p83, %p84
      %s87 = sadd.s32 %s86, 1
      %p90 = scmp.eq.s32.totalorder %s26, 2
      %p91 = scmp.ne.s32.totalorder %s86, %s88
      %p92 = scmp.eq.s32.totalorder %s26, 0
      %p93 = por %p91, %p92
      %p94 = scmp.ne.s32.totalorder %s86, %s88
      %p95 = scmp.eq.s32.totalorder %s31, 2
      %p96 = por %p94, %p95
      %p97 = scmp.ne.s32.totalorder %s88, %s89
      %p98 = scmp.eq.s32.totalorder %s31, 0
      %p99 = por %p97, %p98
      %p100 = scmp.ne.s32.totalorder %s88, %s89
      %p101 = scmp.eq.s32.totalorder %s32, 2
      %p102 = por %p100, %p101
      %p104 = scmp.ne.s32.totalorder %s89, %s103
      %p105 = scmp.eq.s32.totalorder %s32, 0
      %p106 = por %p104, %p105
      %s108 = sadd.s32 %s107, 1
      %p111 = scmp.eq.s32.totalorder %s26, 2
      %p112 = scmp.ne.s32.totalorder %s107, %s109
      %p113 = scmp.eq.s32.totalorder %s26, 0
      %p114 = por %p112, %p113
      %p115 = scmp.ne.s32.totalorder %s107, %s109
      %p116 = scmp.eq.s32.totalorder %s31, 2
      %p117 = por %p115, %p116
      %p118 = scmp.ne.s32.totalorder %s109, %s110
      %p119 = scmp.eq.s32.totalorder %s31, 0
      %p120 = por %p118, %p119
      %p121 = scmp.ne.s32.totalorder %s109, %s110
      %p122 = scmp.eq.s32.totalorder %s32, 2
      %p123 = por %p121, %p122
      %p125 = scmp.ne.s32.totalorder %s110, %s124
      %p126 = scmp.eq.s32.totalorder %s32, 0
      %p127 = por %p125, %p126
      %s129 = sadd.s32 %s128, 1
      %p132 = scmp.eq.s32.totalorder %s26, 2
      %p133 = scmp.ne.s32.totalorder %s128, %s130
      %p134 = scmp.eq.s32.totalorder %s26, 0
      %p135 = por %p133, %p134
      %p136 = scmp.ne.s32.totalorder %s128, %s130
      %p137 = scmp.eq.s32.totalorder %s31, 2
      %p138 = por %p136, %p137
      %p139 = scmp.ne.s32.totalorder %s130, %s131
      %p140 = scmp.eq.s32.totalorder %s31, 0
      %p141 = por %p139, %p140
      %p142 = scmp.ne.s32.totalorder %s130, %s131
      %p143 = scmp.eq.s32.totalorder %s32, 2
      %p144 = por %p142, %p143
      %p146 = scmp.ne.s32.totalorder %s131, %s145
      %p147 = scmp.eq.s32.totalorder %s32, 0
      %p148 = por %p146, %p147
      %s150 = sadd.s32 %s149, 1
      %p153 = scmp.eq.s32.totalorder %s26, 2
      %p154 = scmp.ne.s32.totalorder %s149, %s151
      %p155 = scmp.eq.s32.totalorder %s26, 0
      %p156 = por %p154, %p155
      %p157 = scmp.ne.s32.totalorder %s149, %s151
      %p158 = scmp.eq.s32.totalorder %s31, 2
      %p159 = por %p157, %p158
      %p160 = scmp.ne.s32.totalorder %s151, %s152
      %p161 = scmp.eq.s32.totalorder %s31, 0
      %p162 = por %p160, %p161
      %p163 = scmp.ne.s32.totalorder %s151, %s152
      %p164 = scmp.eq.s32.totalorder %s32, 2
      %p165 = por %p163, %p164
      %p167 = scmp.ne.s32.totalorder %s152, %s166
      %p168 = scmp.eq.s32.totalorder %s32, 0
      %p169 = por %p167, %p168
      %s171 = sadd.s32 %s170, 1
      %p174 = scmp.eq.s32.totalorder %s26, 2
      %p175 = scmp.ne.s32.totalorder %s170, %s172
      %p176 = scmp.eq.s32.totalorder %s26, 0
      %p177 = por %p175, %p176
      %p178 = scmp.ne.s32.totalorder %s170, %s172
      %p179 = scmp.eq.s32.totalorder %s31, 2
      %p180 = por %p178, %p179
      %p181 = scmp.ne.s32.totalorder %s172, %s173
      %p182 = scmp.eq.s32.totalorder %s31, 0
      %p183 = por %p181, %p182
      %p184 = scmp.ne.s32.totalorder %s172, %s173
      %p185 = scmp.eq.s32.totalorder %s32, 2
      %p186 = por %p184, %p185
      %p188 = scmp.ne.s32.totalorder %s173, %s187
      %p189 = scmp.eq.s32.totalorder %s32, 0
      %p190 = por %p188, %p189
      %s192 = sadd.s32 %s191, 1
      %p195 = scmp.eq.s32.totalorder %s26, 2
      %p196 = scmp.ne.s32.totalorder %s191, %s193
      %p197 = scmp.eq.s32.totalorder %s26, 0
      %p198 = por %p196, %p197
      %p199 = scmp.ne.s32.totalorder %s191, %s193
      %p200 = scmp.eq.s32.totalorder %s31, 2
      %p201 = por %p199, %p200
      %p202 = scmp.ne.s32.totalorder %s193, %s194
      %p203 = scmp.eq.s32.totalorder %s31, 0
      %p204 = por %p202, %p203
      %p205 = scmp.ne.s32.totalorder %s193, %s194
      %p206 = scmp.eq.s32.totalorder %s32, 2
      %p207 = por %p205, %p206
      %p209 = scmp.ne.s32.totalorder %s194, %s208
      %p210 = scmp.eq.s32.totalorder %s32, 0
      %p211 = por %p209, %p210
      %s213 = sadd.s32 %s212, 1
      %p216 = scmp.eq.s32.totalorder %s26, 2
      %p217 = scmp.ne.s32.totalorder %s212, %s214
      %p218 = scmp.eq.s32.totalorder %s26, 0
      %p219 = por %p217, %p218
      %p220 = scmp.ne.s32.totalorder %s212, %s214
      %p221 = scmp.eq.s32.totalorder %s31, 2
      %p222 = por %p220, %p221
      %p223 = scmp.ne.s32.totalorder %s214, %s215
      %p224 = scmp.eq.s32.totalorder %s31, 0
      %p225 = por %p223, %p224
      %p226 = scmp.ne.s32.totalorder %s214, %s215
      %p227 = scmp.eq.s32.totalorder %s32, 2
      %p228 = por %p226, %p227
      %p230 = scmp.ne.s32.totalorder %s215, %s229
      %p231 = scmp.eq.s32.totalorder %s32, 0
      %p232 = por %p230, %p231
      %s234 = sadd.s32 %s233, 1
      %p237 = scmp.eq.s32.totalorder %s26, 2
      %p238 = scmp.ne.s32.totalorder %s233, %s235
      %p239 = scmp.eq.s32.totalorder %s26, 0
      %p240 = por %p238, %p239
      %p241 = scmp.ne.s32.totalorder %s233, %s235
      %p242 = scmp.eq.s32.totalorder %s31, 2
      %p243 = por %p241, %p242
      %p244 = scmp.ne.s32.totalorder %s235, %s236
      %p245 = scmp.eq.s32.totalorder %s31, 0
      %p246 = por %p244, %p245
      %p247 = scmp.ne.s32.totalorder %s235, %s236
      %p248 = scmp.eq.s32.totalorder %s32, 2
      %p249 = por %p247, %p248
      %p251 = scmp.ne.s32.totalorder %s236, %s250
      %p252 = scmp.eq.s32.totalorder %s32, 0
      %p253 = por %p251, %p252
      %p254 = scmp.le.s32.totalorder 1, %s26
      %p255 = scmp.lt.s32.totalorder %s26, 4
      %p256 = pnand %p254, %p255
      %p257 = pneg %p256
      // Predicated region
      $region9: #{tpu_custom_call.1} parent=5 // pred_check
        _
      $region10: #{tpu_custom_call.1} parent=5 // pred_check_branch
        %259 = sbr.rel (%p256) target = $region12
      $region11: #{tpu_custom_call.1} parent=5 // pred_region
        %s260 = ssub.s32 %s26, 1
        // Predicated region
        $region13: #{tpu_custom_call.1} parent=11 // pred_check
          %p261 = pneg %p99
        $region14: #{tpu_custom_call.1} parent=11 // pred_check_branch
          %263 = sbr.rel (%p261) target = $region16
        $region15: #{tpu_custom_call.1} parent=11 // pred_region
          %265 = vsyncadd [#allocation7], 0
          %s267 = sshll.u32 %s2, 4
          %s268 = int_to_ptr.hbm [resolvable:$true] %s267
          %s269 = sshll.u32 [#allocation8], 4
          %s270 = int_to_ptr.vmem [resolvable:$true] %s269
          %272 = dma.hbm_to_vmem [thread:$0]  %s268, 64, %s270, [#allocation7]
        $region16: #{tpu_custom_call.1} parent=11 // pred_fallthru
          _
        // Predicated region
        $region17: #{tpu_custom_call.1} parent=11 // pred_check
          %p273 = pneg %p120
        $region18: #{tpu_custom_call.1} parent=11 // pred_check_branch
          %275 = sbr.rel (%p273) target = $region20
        $region19: #{tpu_custom_call.1} parent=11 // pred_region
          %277 = vsyncadd [#allocation10], 0
          %s279 = sshll.u32 %s3, 4
          %s280 = int_to_ptr.hbm [resolvable:$true] %s279
          %s281 = sshll.u32 [#allocation9], 4
          %s282 = int_to_ptr.vmem [resolvable:$true] %s281
          %284 = dma.hbm_to_vmem [thread:$0]  %s280, 256, %s282, [#allocation10]
        $region20: #{tpu_custom_call.1} parent=11 // pred_fallthru
          _
        // Predicated region
        $region21: #{tpu_custom_call.1} parent=11 // pred_check
          %p285 = pneg %p141
        $region22: #{tpu_custom_call.1} parent=11 // pred_check_branch
          %287 = sbr.rel (%p285) target = $region24
        $region23: #{tpu_custom_call.1} parent=11 // pred_region
          %289 = vsyncadd [#allocation10], 0
          %s290 = sshll.u32 %s4, 4
          %s291 = int_to_ptr.hbm [resolvable:$true] %s290
          %s292 = sshll.u32 [#allocation11], 4
          %s293 = int_to_ptr.vmem [resolvable:$true] %s292
          %298 = dma.hbm_to_vmem [thread:$0]  %s291, 8192, %s293, [#allocation10], 128, 128, 8
        $region24: #{tpu_custom_call.1} parent=11 // pred_fallthru
          _
        // Predicated region
        $region25: #{tpu_custom_call.1} parent=11 // pred_check
          %p299 = pneg %p162
        $region26: #{tpu_custom_call.1} parent=11 // pred_check_branch
          %301 = sbr.rel (%p299) target = $region28
        $region27: #{tpu_custom_call.1} parent=11 // pred_region
          _
        $region28: #{tpu_custom_call.1} parent=11 // pred_fallthru
          _
        // Predicated region
        $region29: #{tpu_custom_call.1} parent=11 // pred_check
          %p302 = pneg %p183
        $region30: #{tpu_custom_call.1} parent=11 // pred_check_branch
          %304 = sbr.rel (%p302) target = $region32
        $region31: #{tpu_custom_call.1} parent=11 // pred_region
          %306 = vsyncadd [#allocation13], 0
          %s307 = sshll.u32 %s6, 4
          %s308 = int_to_ptr.hbm [resolvable:$true] %s307
          %s309 = sshll.u32 [#allocation12], 4
          %s310 = int_to_ptr.vmem [resolvable:$true] %s309
          %315 = dma.hbm_to_vmem [thread:$0]  %s308, 8192, %s310, [#allocation13], 256, 256, 16
        $region32: #{tpu_custom_call.1} parent=11 // pred_fallthru
          _
        // Predicated region
        $region33: #{tpu_custom_call.1} parent=11 // pred_check
          %p316 = pneg %p204
        $region34: #{tpu_custom_call.1} parent=11 // pred_check_branch
          %318 = sbr.rel (%p316) target = $region36
        $region35: #{tpu_custom_call.1} parent=11 // pred_region
          _
        $region36: #{tpu_custom_call.1} parent=11 // pred_fallthru
          _
      $region12: #{tpu_custom_call.1} parent=5 // pred_fallthru
        _
      %p319 = scmp.lt.s32.totalorder %s26, 3
      // Predicated region
      $region37: #{tpu_custom_call.1} parent=5 // pred_check
        %p320 = pneg %p319
      $region38: #{tpu_custom_call.1} parent=5 // pred_check_branch
        %322 = sbr.rel (%p320) target = $region40
      $region39: #{tpu_custom_call.1} parent=5 // pred_region
        // Predicated region
        $region41: #{tpu_custom_call.1} parent=39 // pred_check
          %p323 = pneg %p46
        $region42: #{tpu_custom_call.1} parent=39 // pred_check_branch
          %325 = sbr.rel (%p323) target = $region44
        $region43: #{tpu_custom_call.1} parent=39 // pred_region
          %s326 = sand.u32 %s36, 1
          %s327 = scalar_lea.sflag [#allocation4], %s326
          %s328 = sand.u32 %s36, 1
          %s329 = smul.addr %s328, 4
          %s330 = scalar_lea.vmem [#allocation3], %s329
          %332 = vsyncadd %s327, 0
          %s333 = smul.addr %s26, 4
          %s334 = scalar_lea.hbm %s0, %s333
          %s336 = sshll.u32 %s334, 4
          %s337 = int_to_ptr.hbm [resolvable:$true] %s336
          %s338 = sshll.u32 %s330, 4
          %s339 = int_to_ptr.vmem [resolvable:$true] %s338
          %341 = dma.hbm_to_vmem [thread:$0]  %s337, 64, %s339, %s327
        $region44: #{tpu_custom_call.1} parent=39 // pred_fallthru
          _
        // Predicated region
        $region45: #{tpu_custom_call.1} parent=39 // pred_check
          %p342 = pneg %p72
        $region46: #{tpu_custom_call.1} parent=39 // pred_check_branch
          %344 = sbr.rel (%p342) target = $region48
        $region47: #{tpu_custom_call.1} parent=39 // pred_region
          %s345 = sand.u32 %s26, 1
          %s346 = scalar_lea.sflag [#allocation7], %s345
          %s347 = sand.u32 %s62, 1
          %s348 = smul.addr %s347, 256
          %s349 = scalar_lea.vmem [#allocation6], %s348
          %s350 = smul.u32 16, %s26
          %352 = vsyncadd %s346, 0
          %s353 = smul.addr %s350, 4
          %s354 = smul.addr %s353, 4
          %s355 = scalar_lea.hbm %s1, %s354
          %s356 = sshll.u32 %s355, 4
          %s357 = int_to_ptr.hbm [resolvable:$true] %s356
          %s358 = sshll.u32 %s349, 4
          %s359 = int_to_ptr.vmem [resolvable:$true] %s358
          %364 = dma.hbm_to_vmem [thread:$0]  %s357, 4096, %s359, %s346, 256, 256, 16
        $region48: #{tpu_custom_call.1} parent=39 // pred_fallthru
          _
      $region40: #{tpu_custom_call.1} parent=5 // pred_fallthru
        _
      %p365 = scmp.le.s32.totalorder 1, %s26
      %p366 = scmp.lt.s32.totalorder %s26, 4
      %p367 = pnand %p365, %p366
      %p368 = pneg %p367
      // Predicated region
      $region49: #{tpu_custom_call.1} parent=5 // pred_check
        _
      $region50: #{tpu_custom_call.1} parent=5 // pred_check_branch
        %370 = sbr.rel (%p367) target = $region52
      $region51: #{tpu_custom_call.1} parent=5 // pred_region
        %s371 = ssub.s32 %s26, 1
        %s372 = sand.u32 %s39, 1
        %s373 = scalar_lea.sflag [#allocation4], %s372
        %s374 = sand.u32 %s39, 1
        %s375 = smul.addr %s374, 4
        %s376 = scalar_lea.vmem [#allocation3], %s375
        // Predicated region
        $region53: #{tpu_custom_call.1} parent=51 // pred_check
          %p377 = pneg %p52
        $region54: #{tpu_custom_call.1} parent=51 // pred_check_branch
          %379 = sbr.rel (%p377) target = $region56
        $region55: #{tpu_custom_call.1} parent=51 // pred_region
          %381 = dma.done %s373, 64
        $region56: #{tpu_custom_call.1} parent=51 // pred_fallthru
          _
        %s382 = sand.u32 %s31, 1
        %s383 = scalar_lea.sflag [#allocation7], %s382
        %s384 = sand.u32 %s65, 1
        %s385 = smul.addr %s384, 256
        %s386 = scalar_lea.vmem [#allocation6], %s385
        // Predicated region
        $region57: #{tpu_custom_call.1} parent=51 // pred_check
          %p387 = pneg %p78
        $region58: #{tpu_custom_call.1} parent=51 // pred_check_branch
          %389 = sbr.rel (%p387) target = $region60
        $region59: #{tpu_custom_call.1} parent=51 // pred_region
          %391 = dma.done %s383, 4096
        $region60: #{tpu_custom_call.1} parent=51 // pred_fallthru
          _
        // Predicated region
        $region61: #{tpu_custom_call.1} parent=51 // pred_check
          %p392 = pneg %p99
        $region62: #{tpu_custom_call.1} parent=51 // pred_check_branch
          %394 = sbr.rel (%p392) target = $region64
        $region63: #{tpu_custom_call.1} parent=51 // pred_region
          %396 = dma.done [#allocation7], 64
        $region64: #{tpu_custom_call.1} parent=51 // pred_fallthru
          _
        // Predicated region
        $region65: #{tpu_custom_call.1} parent=51 // pred_check
          %p397 = pneg %p120
        $region66: #{tpu_custom_call.1} parent=51 // pred_check_branch
          %399 = sbr.rel (%p397) target = $region68
        $region67: #{tpu_custom_call.1} parent=51 // pred_region
          %401 = dma.done [#allocation10], 256
        $region68: #{tpu_custom_call.1} parent=51 // pred_fallthru
          _
        // Predicated region
        $region69: #{tpu_custom_call.1} parent=51 // pred_check
          %p402 = pneg %p141
        $region70: #{tpu_custom_call.1} parent=51 // pred_check_branch
          %404 = sbr.rel (%p402) target = $region72
        $region71: #{tpu_custom_call.1} parent=51 // pred_region
          %406 = dma.done [#allocation10], 8192
        $region72: #{tpu_custom_call.1} parent=51 // pred_fallthru
          _
        // Predicated region
        $region73: #{tpu_custom_call.1} parent=51 // pred_check
          %p407 = pneg %p183
        $region74: #{tpu_custom_call.1} parent=51 // pred_check_branch
          %409 = sbr.rel (%p407) target = $region76
        $region75: #{tpu_custom_call.1} parent=51 // pred_region
          %411 = dma.done [#allocation13], 8192
        $region76: #{tpu_custom_call.1} parent=51 // pred_fallthru
          _
        %s412 = sand.u32 %s39, 1
        %s413 = scalar_lea.sflag [#allocation4], %s412
        %s414 = sand.u32 %s39, 1
        %s415 = smul.addr %s414, 4
        %s416 = scalar_lea.vmem [#allocation3], %s415
        %p417 = pneg %p52
        %p418 = pneg %p49
        %s419 = sand.u32 %s31, 1
        %s420 = scalar_lea.sflag [#allocation7], %s419
        %s421 = sand.u32 %s65, 1
        %s422 = smul.addr %s421, 256
        %s423 = scalar_lea.vmem [#allocation6], %s422
        %p424 = pneg %p78
        %p425 = pneg %p75
        %p426 = pneg %p99
        %p427 = pneg %p96
        %p428 = pneg %p120
        %p429 = pneg %p117
        %p430 = pneg %p141
        %p431 = pneg %p138
        %p432 = pneg %p162
        %p433 = pneg %p159
        %p434 = pneg %p183
        %p435 = pneg %p180
        %p436 = pneg %p204
        %p437 = pneg %p201
        %p438 = pneg %p225
        %p439 = pneg %p222
        %p440 = pneg %p246
        %p441 = pneg %p243
        %s442 = smul.u32 16, %s31
        %p443 = scmp.eq.s32.totalorder %s31, 0
        // Predicated region
        $region77: #{tpu_custom_call.1} parent=51 // pred_check
          %p444 = pneg %p443
        $region78: #{tpu_custom_call.1} parent=51 // pred_check_branch
          %446 = sbr.rel (%p444) target = $region80
        $region79: #{tpu_custom_call.1} parent=51 // pred_region
          %v447 = vld [vmem:[#allocation8] sm:$0xf]
          %v449 = vperm.slane %v447, 0
          %v450 = vperm.slane %v447, 1
          %v451 = vperm.slane %v447, 2
          %v452 = vperm.slane %v447, 3
          %457 = vst [vmem:[#allocation2] sm:$0xff] %v449
          %458 = vst [vmem:[#allocation2 + $0x8] sm:$0xff] %v450
          %459 = vst [vmem:[#allocation2 + $0x10] sm:$0xff] %v451
          %460 = vst [vmem:[#allocation2 + $0x18] sm:$0xff] %v452
          %v461 = vld [vmem:[#allocation9] sm:$0xff]
          %v462 = vld [vmem:[#allocation9 + $0x8] sm:$0xff]
          %v463 = vld [vmem:[#allocation11] sm:$0xff]
          %v464 = vld [vmem:[#allocation11 + $0x8] sm:$0xff]
          %v465 = vld [vmem:[#allocation11 + $0x10] sm:$0xff]
          %v466 = vld [vmem:[#allocation11 + $0x18] sm:$0xff]
          %v467 = vld [vmem:[#allocation11 + $0x20] sm:$0xff]
          %v468 = vld [vmem:[#allocation11 + $0x28] sm:$0xff]
          %v469 = vld [vmem:[#allocation11 + $0x30] sm:$0xff]
          %v470 = vld [vmem:[#allocation11 + $0x38] sm:$0xff]
          %v471 = vld [vmem:[#allocation11 + $0x40] sm:$0xff]
          %v472 = vld [vmem:[#allocation11 + $0x48] sm:$0xff]
          %v473 = vld [vmem:[#allocation11 + $0x50] sm:$0xff]
          %v474 = vld [vmem:[#allocation11 + $0x58] sm:$0xff]
          %v475 = vld [vmem:[#allocation11 + $0x60] sm:$0xff]
          %v476 = vld [vmem:[#allocation11 + $0x68] sm:$0xff]
          %v477 = vld [vmem:[#allocation11 + $0x70] sm:$0xff]
          %v478 = vld [vmem:[#allocation11 + $0x78] sm:$0xff]
          %v479 = vld [vmem:[#allocation11 + $0x80] sm:$0xff]
          %v480 = vld [vmem:[#allocation11 + $0x88] sm:$0xff]
          %v481 = vld [vmem:[#allocation11 + $0x90] sm:$0xff]
          %v482 = vld [vmem:[#allocation11 + $0x98] sm:$0xff]
          %v483 = vld [vmem:[#allocation11 + $0xa0] sm:$0xff]
          %v484 = vld [vmem:[#allocation11 + $0xa8] sm:$0xff]
          %v485 = vld [vmem:[#allocation11 + $0xb0] sm:$0xff]
          %v486 = vld [vmem:[#allocation11 + $0xb8] sm:$0xff]
          %v487 = vld [vmem:[#allocation11 + $0xc0] sm:$0xff]
          %v488 = vld [vmem:[#allocation11 + $0xc8] sm:$0xff]
          %v489 = vld [vmem:[#allocation11 + $0xd0] sm:$0xff]
          %v490 = vld [vmem:[#allocation11 + $0xd8] sm:$0xff]
          %v491 = vld [vmem:[#allocation11 + $0xe0] sm:$0xff]
          %v492 = vld [vmem:[#allocation11 + $0xe8] sm:$0xff]
          %v493 = vld [vmem:[#allocation11 + $0xf0] sm:$0xff]
          %v494 = vld [vmem:[#allocation11 + $0xf8] sm:$0xff]
          %v495 = vld [vmem:[#allocation11 + $0x100] sm:$0xff]
          %v496 = vld [vmem:[#allocation11 + $0x108] sm:$0xff]
          %v497 = vld [vmem:[#allocation11 + $0x110] sm:$0xff]
          %v498 = vld [vmem:[#allocation11 + $0x118] sm:$0xff]
          %v499 = vld [vmem:[#allocation11 + $0x120] sm:$0xff]
          %v500 = vld [vmem:[#allocation11 + $0x128] sm:$0xff]
          %v501 = vld [vmem:[#allocation11 + $0x130] sm:$0xff]
          %v502 = vld [vmem:[#allocation11 + $0x138] sm:$0xff]
          %v503 = vld [vmem:[#allocation11 + $0x140] sm:$0xff]
          %v504 = vld [vmem:[#allocation11 + $0x148] sm:$0xff]
          %v505 = vld [vmem:[#allocation11 + $0x150] sm:$0xff]
          %v506 = vld [vmem:[#allocation11 + $0x158] sm:$0xff]
          %v507 = vld [vmem:[#allocation11 + $0x160] sm:$0xff]
          %v508 = vld [vmem:[#allocation11 + $0x168] sm:$0xff]
          %v509 = vld [vmem:[#allocation11 + $0x170] sm:$0xff]
          %v510 = vld [vmem:[#allocation11 + $0x178] sm:$0xff]
          %v511 = vld [vmem:[#allocation11 + $0x180] sm:$0xff]
          %v512 = vld [vmem:[#allocation11 + $0x188] sm:$0xff]
          %v513 = vld [vmem:[#allocation11 + $0x190] sm:$0xff]
          %v514 = vld [vmem:[#allocation11 + $0x198] sm:$0xff]
          %v515 = vld [vmem:[#allocation11 + $0x1a0] sm:$0xff]
          %v516 = vld [vmem:[#allocation11 + $0x1a8] sm:$0xff]
          %v517 = vld [vmem:[#allocation11 + $0x1b0] sm:$0xff]
          %v518 = vld [vmem:[#allocation11 + $0x1b8] sm:$0xff]
          %v519 = vld [vmem:[#allocation11 + $0x1c0] sm:$0xff]
          %v520 = vld [vmem:[#allocation11 + $0x1c8] sm:$0xff]
          %v521 = vld [vmem:[#allocation11 + $0x1d0] sm:$0xff]
          %v522 = vld [vmem:[#allocation11 + $0x1d8] sm:$0xff]
          %v523 = vld [vmem:[#allocation11 + $0x1e0] sm:$0xff]
          %v524 = vld [vmem:[#allocation11 + $0x1e8] sm:$0xff]
          %v525 = vld [vmem:[#allocation11 + $0x1f0] sm:$0xff]
          %v526 = vld [vmem:[#allocation11 + $0x1f8] sm:$0xff]
          %v527 = vld [vmem:[%s5] sm:$0x3]
          %v529 = vperm.slane %v527, 0
          %v530 = vperm.slane %v527, 1
          %v535 = vunpack.c.l.b16 %v461
          %v536 = vunpack.c.h.b16 %v461
          %v537 = vunpack.c.l.b16 %v462
          %v538 = vunpack.c.h.b16 %v462
          %v539 = vpack.c.b16 %v535, %v535
          %v540 = vpack.c.b16 %v536, %v536
          %v541 = vpack.c.b16 %v537, %v537
          %v542 = vpack.c.b16 %v538, %v538
          %v611 = vunpack.c.l.b16 %v463
          %v612 = vunpack.c.h.b16 %v463
          %v613 = vunpack.c.l.b16 %v464
          %v614 = vunpack.c.h.b16 %v464
          %v615 = vunpack.c.l.b16 %v465
          %v616 = vunpack.c.h.b16 %v465
          %v617 = vunpack.c.l.b16 %v466
          %v618 = vunpack.c.h.b16 %v466
          %v619 = vunpack.c.l.b16 %v467
          %v620 = vunpack.c.h.b16 %v467
          %v621 = vunpack.c.l.b16 %v468
          %v622 = vunpack.c.h.b16 %v468
          %v623 = vunpack.c.l.b16 %v469
          %v624 = vunpack.c.h.b16 %v469
          %v625 = vunpack.c.l.b16 %v470
          %v626 = vunpack.c.h.b16 %v470
          %v627 = vunpack.c.l.b16 %v471
          %v628 = vunpack.c.h.b16 %v471
          %v629 = vunpack.c.l.b16 %v472
          %v630 = vunpack.c.h.b16 %v472
          %v631 = vunpack.c.l.b16 %v473
          %v632 = vunpack.c.h.b16 %v473
          %v633 = vunpack.c.l.b16 %v474
          %v634 = vunpack.c.h.b16 %v474
          %v635 = vunpack.c.l.b16 %v475
          %v636 = vunpack.c.h.b16 %v475
          %v637 = vunpack.c.l.b16 %v476
          %v638 = vunpack.c.h.b16 %v476
          %v639 = vunpack.c.l.b16 %v477
          %v640 = vunpack.c.h.b16 %v477
          %v641 = vunpack.c.l.b16 %v478
          %v642 = vunpack.c.h.b16 %v478
          %v643 = vunpack.c.l.b16 %v479
          %v644 = vunpack.c.h.b16 %v479
          %v645 = vunpack.c.l.b16 %v480
          %v646 = vunpack.c.h.b16 %v480
          %v647 = vunpack.c.l.b16 %v481
          %v648 = vunpack.c.h.b16 %v481
          %v649 = vunpack.c.l.b16 %v482
          %v650 = vunpack.c.h.b16 %v482
          %v651 = vunpack.c.l.b16 %v483
          %v652 = vunpack.c.h.b16 %v483
          %v653 = vunpack.c.l.b16 %v484
          %v654 = vunpack.c.h.b16 %v484
          %v655 = vunpack.c.l.b16 %v485
          %v656 = vunpack.c.h.b16 %v485
          %v657 = vunpack.c.l.b16 %v486
          %v658 = vunpack.c.h.b16 %v486
          %v659 = vunpack.c.l.b16 %v487
          %v660 = vunpack.c.h.b16 %v487
          %v661 = vunpack.c.l.b16 %v488
          %v662 = vunpack.c.h.b16 %v488
          %v663 = vunpack.c.l.b16 %v489
          %v664 = vunpack.c.h.b16 %v489
          %v665 = vunpack.c.l.b16 %v490
          %v666 = vunpack.c.h.b16 %v490
          %v667 = vunpack.c.l.b16 %v491
          %v668 = vunpack.c.h.b16 %v491
          %v669 = vunpack.c.l.b16 %v492
          %v670 = vunpack.c.h.b16 %v492
          %v671 = vunpack.c.l.b16 %v493
          %v672 = vunpack.c.h.b16 %v493
          %v673 = vunpack.c.l.b16 %v494
          %v674 = vunpack.c.h.b16 %v494
          %v675 = vunpack.c.l.b16 %v495
          %v676 = vunpack.c.h.b16 %v495
          %v677 = vunpack.c.l.b16 %v496
          %v678 = vunpack.c.h.b16 %v496
          %v679 = vunpack.c.l.b16 %v497
          %v680 = vunpack.c.h.b16 %v497
          %v681 = vunpack.c.l.b16 %v498
          %v682 = vunpack.c.h.b16 %v498
          %v683 = vunpack.c.l.b16 %v499
          %v684 = vunpack.c.h.b16 %v499
          %v685 = vunpack.c.l.b16 %v500
          %v686 = vunpack.c.h.b16 %v500
          %v687 = vunpack.c.l.b16 %v501
          %v688 = vunpack.c.h.b16 %v501
          %v689 = vunpack.c.l.b16 %v502
          %v690 = vunpack.c.h.b16 %v502
          %v691 = vunpack.c.l.b16 %v503
          %v692 = vunpack.c.h.b16 %v503
          %v693 = vunpack.c.l.b16 %v504
          %v694 = vunpack.c.h.b16 %v504
          %v695 = vunpack.c.l.b16 %v505
          %v696 = vunpack.c.h.b16 %v505
          %v697 = vunpack.c.l.b16 %v506
          %v698 = vunpack.c.h.b16 %v506
          %v699 = vunpack.c.l.b16 %v507
          %v700 = vunpack.c.h.b16 %v507
          %v701 = vunpack.c.l.b16 %v508
          %v702 = vunpack.c.h.b16 %v508
          %v703 = vunpack.c.l.b16 %v509
          %v704 = vunpack.c.h.b16 %v509
          %v705 = vunpack.c.l.b16 %v510
          %v706 = vunpack.c.h.b16 %v510
          %v707 = vunpack.c.l.b16 %v511
          %v708 = vunpack.c.h.b16 %v511
          %v709 = vunpack.c.l.b16 %v512
          %v710 = vunpack.c.h.b16 %v512
          %v711 = vunpack.c.l.b16 %v513
          %v712 = vunpack.c.h.b16 %v513
          %v713 = vunpack.c.l.b16 %v514
          %v714 = vunpack.c.h.b16 %v514
          %v715 = vunpack.c.l.b16 %v515
          %v716 = vunpack.c.h.b16 %v515
          %v717 = vunpack.c.l.b16 %v516
          %v718 = vunpack.c.h.b16 %v516
          %v719 = vunpack.c.l.b16 %v517
          %v720 = vunpack.c.h.b16 %v517
          %v721 = vunpack.c.l.b16 %v518
          %v722 = vunpack.c.h.b16 %v518
          %v723 = vunpack.c.l.b16 %v519
          %v724 = vunpack.c.h.b16 %v519
          %v725 = vunpack.c.l.b16 %v520
          %v726 = vunpack.c.h.b16 %v520
          %v727 = vunpack.c.l.b16 %v521
          %v728 = vunpack.c.h.b16 %v521
          %v729 = vunpack.c.l.b16 %v522
          %v730 = vunpack.c.h.b16 %v522
          %v731 = vunpack.c.l.b16 %v523
          %v732 = vunpack.c.h.b16 %v523
          %v733 = vunpack.c.l.b16 %v524
          %v734 = vunpack.c.h.b16 %v524
          %v735 = vunpack.c.l.b16 %v525
          %v736 = vunpack.c.h.b16 %v525
          %v737 = vunpack.c.l.b16 %v526
          %v738 = vunpack.c.h.b16 %v526
          %v739 = vpack.c.b16 %v613, %v611
          %v740 = vpack.c.b16 %v614, %v612
          %v741 = vpack.c.b16 %v617, %v615
          %v742 = vpack.c.b16 %v618, %v616
          %v743 = vpack.c.b16 %v621, %v619
          %v744 = vpack.c.b16 %v622, %v620
          %v745 = vpack.c.b16 %v625, %v623
          %v746 = vpack.c.b16 %v626, %v624
          %v747 = vpack.c.b16 %v629, %v627
          %v748 = vpack.c.b16 %v630, %v628
          %v749 = vpack.c.b16 %v633, %v631
          %v750 = vpack.c.b16 %v634, %v632
          %v751 = vpack.c.b16 %v637, %v635
          %v752 = vpack.c.b16 %v638, %v636
          %v753 = vpack.c.b16 %v641, %v639
          %v754 = vpack.c.b16 %v642, %v640
          %v755 = vpack.c.b16 %v645, %v643
          %v756 = vpack.c.b16 %v646, %v644
          %v757 = vpack.c.b16 %v649, %v647
          %v758 = vpack.c.b16 %v650, %v648
          %v759 = vpack.c.b16 %v653, %v651
          %v760 = vpack.c.b16 %v654, %v652
          %v761 = vpack.c.b16 %v657, %v655
          %v762 = vpack.c.b16 %v658, %v656
          %v763 = vpack.c.b16 %v661, %v659
          %v764 = vpack.c.b16 %v662, %v660
          %v765 = vpack.c.b16 %v665, %v663
          %v766 = vpack.c.b16 %v666, %v664
          %v767 = vpack.c.b16 %v669, %v667
          %v768 = vpack.c.b16 %v670, %v668
          %v769 = vpack.c.b16 %v673, %v671
          %v770 = vpack.c.b16 %v674, %v672
          %v771 = vpack.c.b16 %v677, %v675
          %v772 = vpack.c.b16 %v678, %v676
          %v773 = vpack.c.b16 %v681, %v679
          %v774 = vpack.c.b16 %v682, %v680
          %v775 = vpack.c.b16 %v685, %v683
          %v776 = vpack.c.b16 %v686, %v684
          %v777 = vpack.c.b16 %v689, %v687
          %v778 = vpack.c.b16 %v690, %v688
          %v779 = vpack.c.b16 %v693, %v691
          %v780 = vpack.c.b16 %v694, %v692
          %v781 = vpack.c.b16 %v697, %v695
          %v782 = vpack.c.b16 %v698, %v696
          %v783 = vpack.c.b16 %v701, %v699
          %v784 = vpack.c.b16 %v702, %v700
          %v785 = vpack.c.b16 %v705, %v703
          %v786 = vpack.c.b16 %v706, %v704
          %v787 = vpack.c.b16 %v709, %v707
          %v788 = vpack.c.b16 %v710, %v708
          %v789 = vpack.c.b16 %v713, %v711
          %v790 = vpack.c.b16 %v714, %v712
          %v791 = vpack.c.b16 %v717, %v715
          %v792 = vpack.c.b16 %v718, %v716
          %v793 = vpack.c.b16 %v721, %v719
          %v794 = vpack.c.b16 %v722, %v720
          %v795 = vpack.c.b16 %v725, %v723
          %v796 = vpack.c.b16 %v726, %v724
          %v797 = vpack.c.b16 %v729, %v727
          %v798 = vpack.c.b16 %v730, %v728
          %v799 = vpack.c.b16 %v733, %v731
          %v800 = vpack.c.b16 %v734, %v732
          %v801 = vpack.c.b16 %v737, %v735
          %v802 = vpack.c.b16 %v738, %v736
          %867 = vmatpush.bf16.msra.mxu0 %v753
          %868 = vmatpush.bf16.msra.mxu0 %v751
          %869 = vmatpush.bf16.msra.mxu0 %v749
          %870 = vmatpush.bf16.msra.mxu0 %v747
          %871 = vmatpush.bf16.msra.mxu0 %v745
          %872 = vmatpush.bf16.msra.mxu0 %v743
          %873 = vmatpush.bf16.msra.mxu0 %v741
          %874 = vmatpush.bf16.msra.mxu0 %v739
          %875 = vmatmul.bf16.gmra.mxu0 %v539
          %v876 = vpop.f32.mrf.mxu0
          %v877 = vadd.f32 %v529, %v876
          %v878 = vpop.f32.mrf.mxu0
          %879 = vdwg.mxu0
          %880 = vmatpush.bf16.msra.mxu0 %v769
          %881 = vmatpush.bf16.msra.mxu0 %v767
          %882 = vmatpush.bf16.msra.mxu0 %v765
          %883 = vmatpush.bf16.msra.mxu0 %v763
          %884 = vmatpush.bf16.msra.mxu0 %v761
          %885 = vmatpush.bf16.msra.mxu0 %v759
          %886 = vmatpush.bf16.msra.mxu0 %v757
          %887 = vmatpush.bf16.msra.mxu0 %v755
          %888 = vmatmul.bf16.gmra.mxu0 %v540
          %v889 = vpop.f32.mrf.mxu0
          %v890 = vadd.f32 %v877, %v889
          %v891 = vpop.f32.mrf.mxu0
          %892 = vdwg.mxu0
          %893 = vmatpush.bf16.msra.mxu0 %v785
          %894 = vmatpush.bf16.msra.mxu0 %v783
          %895 = vmatpush.bf16.msra.mxu0 %v781
          %896 = vmatpush.bf16.msra.mxu0 %v779
          %897 = vmatpush.bf16.msra.mxu0 %v777
          %898 = vmatpush.bf16.msra.mxu0 %v775
          %899 = vmatpush.bf16.msra.mxu0 %v773
          %900 = vmatpush.bf16.msra.mxu0 %v771
          %901 = vmatmul.bf16.gmra.mxu0 %v541
          %v902 = vpop.f32.mrf.mxu0
          %v903 = vadd.f32 %v890, %v902
          %v904 = vpop.f32.mrf.mxu0
          %905 = vdwg.mxu0
          %906 = vmatpush.bf16.msra.mxu0 %v801
          %907 = vmatpush.bf16.msra.mxu0 %v799
          %908 = vmatpush.bf16.msra.mxu0 %v797
          %909 = vmatpush.bf16.msra.mxu0 %v795
          %910 = vmatpush.bf16.msra.mxu0 %v793
          %911 = vmatpush.bf16.msra.mxu0 %v791
          %912 = vmatpush.bf16.msra.mxu0 %v789
          %913 = vmatpush.bf16.msra.mxu0 %v787
          %914 = vmatmul.bf16.gmra.mxu0 %v542
          %v915 = vpop.f32.mrf.mxu0
          %v916 = vadd.f32 %v903, %v915
          %v917 = vpop.f32.mrf.mxu0
          %918 = vdwg.mxu0
          %919 = vmatpush.bf16.msra.mxu0 %v754
          %920 = vmatpush.bf16.msra.mxu0 %v752
          %921 = vmatpush.bf16.msra.mxu0 %v750
          %922 = vmatpush.bf16.msra.mxu0 %v748
          %923 = vmatpush.bf16.msra.mxu0 %v746
          %924 = vmatpush.bf16.msra.mxu0 %v744
          %925 = vmatpush.bf16.msra.mxu0 %v742
          %926 = vmatpush.bf16.msra.mxu0 %v740
          %927 = vmatmul.bf16.gmra.mxu0 %v539
          %v928 = vpop.f32.mrf.mxu0
          %v929 = vadd.f32 %v530, %v928
          %v930 = vpop.f32.mrf.mxu0
          %931 = vdwg.mxu0
          %932 = vmatpush.bf16.msra.mxu0 %v770
          %933 = vmatpush.bf16.msra.mxu0 %v768
          %934 = vmatpush.bf16.msra.mxu0 %v766
          %935 = vmatpush.bf16.msra.mxu0 %v764
          %936 = vmatpush.bf16.msra.mxu0 %v762
          %937 = vmatpush.bf16.msra.mxu0 %v760
          %938 = vmatpush.bf16.msra.mxu0 %v758
          %939 = vmatpush.bf16.msra.mxu0 %v756
          %940 = vmatmul.bf16.gmra.mxu0 %v540
          %v941 = vpop.f32.mrf.mxu0
          %v942 = vadd.f32 %v929, %v941
          %v943 = vpop.f32.mrf.mxu0
          %944 = vdwg.mxu0
          %945 = vmatpush.bf16.msra.mxu0 %v786
          %946 = vmatpush.bf16.msra.mxu0 %v784
          %947 = vmatpush.bf16.msra.mxu0 %v782
          %948 = vmatpush.bf16.msra.mxu0 %v780
          %949 = vmatpush.bf16.msra.mxu0 %v778
          %950 = vmatpush.bf16.msra.mxu0 %v776
          %951 = vmatpush.bf16.msra.mxu0 %v774
          %952 = vmatpush.bf16.msra.mxu0 %v772
          %953 = vmatmul.bf16.gmra.mxu0 %v541
          %v954 = vpop.f32.mrf.mxu0
          %v955 = vadd.f32 %v942, %v954
          %v956 = vpop.f32.mrf.mxu0
          %957 = vdwg.mxu0
          %958 = vmatpush.bf16.msra.mxu0 %v802
          %959 = vmatpush.bf16.msra.mxu0 %v800
          %960 = vmatpush.bf16.msra.mxu0 %v798
          %961 = vmatpush.bf16.msra.mxu0 %v796
          %962 = vmatpush.bf16.msra.mxu0 %v794
          %963 = vmatpush.bf16.msra.mxu0 %v792
          %964 = vmatpush.bf16.msra.mxu0 %v790
          %965 = vmatpush.bf16.msra.mxu0 %v788
          %966 = vmatmul.bf16.gmra.mxu0 %v542
          %v967 = vpop.f32.mrf.mxu0
          %v968 = vadd.f32 %v955, %v967
          %v969 = vpop.f32.mrf.mxu0
          %970 = vdwg.mxu0
          %v971 = vmax.f32 %v916, 0.0
          %v972 = vmax.f32 %v968, 0.0
          %v973 = vpack.c.bf16 %v971, %v971
          %v974 = vpack.c.bf16 %v972, %v972
          %v975 = vld [vmem:[#allocation12] sm:$0xff]
          %v976 = vld [vmem:[#allocation12 + $0x8] sm:$0xff]
          %v977 = vld [vmem:[#allocation12 + $0x10] sm:$0xff]
          %v978 = vld [vmem:[#allocation12 + $0x18] sm:$0xff]
          %v979 = vld [vmem:[#allocation12 + $0x20] sm:$0xff]
          %v980 = vld [vmem:[#allocation12 + $0x28] sm:$0xff]
          %v981 = vld [vmem:[#allocation12 + $0x30] sm:$0xff]
          %v982 = vld [vmem:[#allocation12 + $0x38] sm:$0xff]
          %v983 = vld [vmem:[#allocation12 + $0x40] sm:$0xff]
          %v984 = vld [vmem:[#allocation12 + $0x48] sm:$0xff]
          %v985 = vld [vmem:[#allocation12 + $0x50] sm:$0xff]
          %v986 = vld [vmem:[#allocation12 + $0x58] sm:$0xff]
          %v987 = vld [vmem:[#allocation12 + $0x60] sm:$0xff]
          %v988 = vld [vmem:[#allocation12 + $0x68] sm:$0xff]
          %v989 = vld [vmem:[#allocation12 + $0x70] sm:$0xff]
          %v990 = vld [vmem:[#allocation12 + $0x78] sm:$0xff]
          %v991 = vld [vmem:[#allocation12 + $0x80] sm:$0xff]
          %v992 = vld [vmem:[#allocation12 + $0x88] sm:$0xff]
          %v993 = vld [vmem:[#allocation12 + $0x90] sm:$0xff]
          %v994 = vld [vmem:[#allocation12 + $0x98] sm:$0xff]
          %v995 = vld [vmem:[#allocation12 + $0xa0] sm:$0xff]
          %v996 = vld [vmem:[#allocation12 + $0xa8] sm:$0xff]
          %v997 = vld [vmem:[#allocation12 + $0xb0] sm:$0xff]
          %v998 = vld [vmem:[#allocation12 + $0xb8] sm:$0xff]
          %v999 = vld [vmem:[#allocation12 + $0xc0] sm:$0xff]
          %v1000 = vld [vmem:[#allocation12 + $0xc8] sm:$0xff]
          %v1001 = vld [vmem:[#allocation12 + $0xd0] sm:$0xff]
          %v1002 = vld [vmem:[#allocation12 + $0xd8] sm:$0xff]
          %v1003 = vld [vmem:[#allocation12 + $0xe0] sm:$0xff]
          %v1004 = vld [vmem:[#allocation12 + $0xe8] sm:$0xff]
          %v1005 = vld [vmem:[#allocation12 + $0xf0] sm:$0xff]
          %v1006 = vld [vmem:[#allocation12 + $0xf8] sm:$0xff]
          %v1007 = vld [vmem:[#allocation12 + $0x100] sm:$0xff]
          %v1008 = vld [vmem:[#allocation12 + $0x108] sm:$0xff]
          %v1009 = vld [vmem:[#allocation12 + $0x110] sm:$0xff]
          %v1010 = vld [vmem:[#allocation12 + $0x118] sm:$0xff]
          %v1011 = vld [vmem:[#allocation12 + $0x120] sm:$0xff]
          %v1012 = vld [vmem:[#allocation12 + $0x128] sm:$0xff]
          %v1013 = vld [vmem:[#allocation12 + $0x130] sm:$0xff]
          %v1014 = vld [vmem:[#allocation12 + $0x138] sm:$0xff]
          %v1015 = vld [vmem:[#allocation12 + $0x140] sm:$0xff]
          %v1016 = vld [vmem:[#allocation12 + $0x148] sm:$0xff]
          %v1017 = vld [vmem:[#allocation12 + $0x150] sm:$0xff]
          %v1018 = vld [vmem:[#allocation12 + $0x158] sm:$0xff]
          %v1019 = vld [vmem:[#allocation12 + $0x160] sm:$0xff]
          %v1020 = vld [vmem:[#allocation12 + $0x168] sm:$0xff]
          %v1021 = vld [vmem:[#allocation12 + $0x170] sm:$0xff]
          %v1022 = vld [vmem:[#allocation12 + $0x178] sm:$0xff]
          %v1023 = vld [vmem:[#allocation12 + $0x180] sm:$0xff]
          %v1024 = vld [vmem:[#allocation12 + $0x188] sm:$0xff]
          %v1025 = vld [vmem:[#allocation12 + $0x190] sm:$0xff]
          %v1026 = vld [vmem:[#allocation12 + $0x198] sm:$0xff]
          %v1027 = vld [vmem:[#allocation12 + $0x1a0] sm:$0xff]
          %v1028 = vld [vmem:[#allocation12 + $0x1a8] sm:$0xff]
          %v1029 = vld [vmem:[#allocation12 + $0x1b0] sm:$0xff]
          %v1030 = vld [vmem:[#allocation12 + $0x1b8] sm:$0xff]
          %v1031 = vld [vmem:[#allocation12 + $0x1c0] sm:$0xff]
          %v1032 = vld [vmem:[#allocation12 + $0x1c8] sm:$0xff]
          %v1033 = vld [vmem:[#allocation12 + $0x1d0] sm:$0xff]
          %v1034 = vld [vmem:[#allocation12 + $0x1d8] sm:$0xff]
          %v1035 = vld [vmem:[#allocation12 + $0x1e0] sm:$0xff]
          %v1036 = vld [vmem:[#allocation12 + $0x1e8] sm:$0xff]
          %v1037 = vld [vmem:[#allocation12 + $0x1f0] sm:$0xff]
          %v1038 = vld [vmem:[#allocation12 + $0x1f8] sm:$0xff]
          %v1039 = vld [vmem:[%s7] sm:$0xf]
          %v1041 = vperm.slane %v1039, 0
          %v1042 = vperm.slane %v1039, 1
          %v1043 = vperm.slane %v1039, 2
          %v1044 = vperm.slane %v1039, 3
          %v1113 = vunpack.c.l.b16 %v975
          %v1114 = vunpack.c.h.b16 %v975
          %v1115 = vunpack.c.l.b16 %v976
          %v1116 = vunpack.c.h.b16 %v976
          %v1117 = vunpack.c.l.b16 %v977
          %v1118 = vunpack.c.h.b16 %v977
          %v1119 = vunpack.c.l.b16 %v978
          %v1120 = vunpack.c.h.b16 %v978
          %v1121 = vunpack.c.l.b16 %v979
          %v1122 = vunpack.c.h.b16 %v979
          %v1123 = vunpack.c.l.b16 %v980
          %v1124 = vunpack.c.h.b16 %v980
          %v1125 = vunpack.c.l.b16 %v981
          %v1126 = vunpack.c.h.b16 %v981
          %v1127 = vunpack.c.l.b16 %v982
          %v1128 = vunpack.c.h.b16 %v982
          %v1129 = vunpack.c.l.b16 %v983
          %v1130 = vunpack.c.h.b16 %v983
          %v1131 = vunpack.c.l.b16 %v984
          %v1132 = vunpack.c.h.b16 %v984
          %v1133 = vunpack.c.l.b16 %v985
          %v1134 = vunpack.c.h.b16 %v985
          %v1135 = vunpack.c.l.b16 %v986
          %v1136 = vunpack.c.h.b16 %v986
          %v1137 = vunpack.c.l.b16 %v987
          %v1138 = vunpack.c.h.b16 %v987
          %v1139 = vunpack.c.l.b16 %v988
          %v1140 = vunpack.c.h.b16 %v988
          %v1141 = vunpack.c.l.b16 %v989
          %v1142 = vunpack.c.h.b16 %v989
          %v1143 = vunpack.c.l.b16 %v990
          %v1144 = vunpack.c.h.b16 %v990
          %v1145 = vunpack.c.l.b16 %v991
          %v1146 = vunpack.c.h.b16 %v991
          %v1147 = vunpack.c.l.b16 %v992
          %v1148 = vunpack.c.h.b16 %v992
          %v1149 = vunpack.c.l.b16 %v993
          %v1150 = vunpack.c.h.b16 %v993
          %v1151 = vunpack.c.l.b16 %v994
          %v1152 = vunpack.c.h.b16 %v994
          %v1153 = vunpack.c.l.b16 %v995
          %v1154 = vunpack.c.h.b16 %v995
          %v1155 = vunpack.c.l.b16 %v996
          %v1156 = vunpack.c.h.b16 %v996
          %v1157 = vunpack.c.l.b16 %v997
          %v1158 = vunpack.c.h.b16 %v997
          %v1159 = vunpack.c.l.b16 %v998
          %v1160 = vunpack.c.h.b16 %v998
          %v1161 = vunpack.c.l.b16 %v999
          %v1162 = vunpack.c.h.b16 %v999
          %v1163 = vunpack.c.l.b16 %v1000
          %v1164 = vunpack.c.h.b16 %v1000
          %v1165 = vunpack.c.l.b16 %v1001
          %v1166 = vunpack.c.h.b16 %v1001
          %v1167 = vunpack.c.l.b16 %v1002
          %v1168 = vunpack.c.h.b16 %v1002
          %v1169 = vunpack.c.l.b16 %v1003
          %v1170 = vunpack.c.h.b16 %v1003
          %v1171 = vunpack.c.l.b16 %v1004
          %v1172 = vunpack.c.h.b16 %v1004
          %v1173 = vunpack.c.l.b16 %v1005
          %v1174 = vunpack.c.h.b16 %v1005
          %v1175 = vunpack.c.l.b16 %v1006
          %v1176 = vunpack.c.h.b16 %v1006
          %v1177 = vunpack.c.l.b16 %v1007
          %v1178 = vunpack.c.h.b16 %v1007
          %v1179 = vunpack.c.l.b16 %v1008
          %v1180 = vunpack.c.h.b16 %v1008
          %v1181 = vunpack.c.l.b16 %v1009
          %v1182 = vunpack.c.h.b16 %v1009
          %v1183 = vunpack.c.l.b16 %v1010
          %v1184 = vunpack.c.h.b16 %v1010
          %v1185 = vunpack.c.l.b16 %v1011
          %v1186 = vunpack.c.h.b16 %v1011
          %v1187 = vunpack.c.l.b16 %v1012
          %v1188 = vunpack.c.h.b16 %v1012
          %v1189 = vunpack.c.l.b16 %v1013
          %v1190 = vunpack.c.h.b16 %v1013
          %v1191 = vunpack.c.l.b16 %v1014
          %v1192 = vunpack.c.h.b16 %v1014
          %v1193 = vunpack.c.l.b16 %v1015
          %v1194 = vunpack.c.h.b16 %v1015
          %v1195 = vunpack.c.l.b16 %v1016
          %v1196 = vunpack.c.h.b16 %v1016
          %v1197 = vunpack.c.l.b16 %v1017
          %v1198 = vunpack.c.h.b16 %v1017
          %v1199 = vunpack.c.l.b16 %v1018
          %v1200 = vunpack.c.h.b16 %v1018
          %v1201 = vunpack.c.l.b16 %v1019
          %v1202 = vunpack.c.h.b16 %v1019
          %v1203 = vunpack.c.l.b16 %v1020
          %v1204 = vunpack.c.h.b16 %v1020
          %v1205 = vunpack.c.l.b16 %v1021
          %v1206 = vunpack.c.h.b16 %v1021
          %v1207 = vunpack.c.l.b16 %v1022
          %v1208 = vunpack.c.h.b16 %v1022
          %v1209 = vunpack.c.l.b16 %v1023
          %v1210 = vunpack.c.h.b16 %v1023
          %v1211 = vunpack.c.l.b16 %v1024
          %v1212 = vunpack.c.h.b16 %v1024
          %v1213 = vunpack.c.l.b16 %v1025
          %v1214 = vunpack.c.h.b16 %v1025
          %v1215 = vunpack.c.l.b16 %v1026
          %v1216 = vunpack.c.h.b16 %v1026
          %v1217 = vunpack.c.l.b16 %v1027
          %v1218 = vunpack.c.h.b16 %v1027
          %v1219 = vunpack.c.l.b16 %v1028
          %v1220 = vunpack.c.h.b16 %v1028
          %v1221 = vunpack.c.l.b16 %v1029
          %v1222 = vunpack.c.h.b16 %v1029
          %v1223 = vunpack.c.l.b16 %v1030
          %v1224 = vunpack.c.h.b16 %v1030
          %v1225 = vunpack.c.l.b16 %v1031
          %v1226 = vunpack.c.h.b16 %v1031
          %v1227 = vunpack.c.l.b16 %v1032
          %v1228 = vunpack.c.h.b16 %v1032
          %v1229 = vunpack.c.l.b16 %v1033
          %v1230 = vunpack.c.h.b16 %v1033
          %v1231 = vunpack.c.l.b16 %v1034
          %v1232 = vunpack.c.h.b16 %v1034
          %v1233 = vunpack.c.l.b16 %v1035
          %v1234 = vunpack.c.h.b16 %v1035
          %v1235 = vunpack.c.l.b16 %v1036
          %v1236 = vunpack.c.h.b16 %v1036
          %v1237 = vunpack.c.l.b16 %v1037
          %v1238 = vunpack.c.h.b16 %v1037
          %v1239 = vunpack.c.l.b16 %v1038
          %v1240 = vunpack.c.h.b16 %v1038
          %v1241 = vpack.c.b16 %v1117, %v1113
          %v1242 = vpack.c.b16 %v1118, %v1114
          %v1243 = vpack.c.b16 %v1119, %v1115
          %v1244 = vpack.c.b16 %v1120, %v1116
          %v1245 = vpack.c.b16 %v1125, %v1121
          %v1246 = vpack.c.b16 %v1126, %v1122
          %v1247 = vpack.c.b16 %v1127, %v1123
          %v1248 = vpack.c.b16 %v1128, %v1124
          %v1249 = vpack.c.b16 %v1133, %v1129
          %v1250 = vpack.c.b16 %v1134, %v1130
          %v1251 = vpack.c.b16 %v1135, %v1131
          %v1252 = vpack.c.b16 %v1136, %v1132
          %v1253 = vpack.c.b16 %v1141, %v1137
          %v1254 = vpack.c.b16 %v1142, %v1138
          %v1255 = vpack.c.b16 %v1143, %v1139
          %v1256 = vpack.c.b16 %v1144, %v1140
          %v1257 = vpack.c.b16 %v1149, %v1145
          %v1258 = vpack.c.b16 %v1150, %v1146
          %v1259 = vpack.c.b16 %v1151, %v1147
          %v1260 = vpack.c.b16 %v1152, %v1148
          %v1261 = vpack.c.b16 %v1157, %v1153
          %v1262 = vpack.c.b16 %v1158, %v1154
          %v1263 = vpack.c.b16 %v1159, %v1155
          %v1264 = vpack.c.b16 %v1160, %v1156
          %v1265 = vpack.c.b16 %v1165, %v1161
          %v1266 = vpack.c.b16 %v1166, %v1162
          %v1267 = vpack.c.b16 %v1167, %v1163
          %v1268 = vpack.c.b16 %v1168, %v1164
          %v1269 = vpack.c.b16 %v1173, %v1169
          %v1270 = vpack.c.b16 %v1174, %v1170
          %v1271 = vpack.c.b16 %v1175, %v1171
          %v1272 = vpack.c.b16 %v1176, %v1172
          %v1273 = vpack.c.b16 %v1181, %v1177
          %v1274 = vpack.c.b16 %v1182, %v1178
          %v1275 = vpack.c.b16 %v1183, %v1179
          %v1276 = vpack.c.b16 %v1184, %v1180
          %v1277 = vpack.c.b16 %v1189, %v1185
          %v1278 = vpack.c.b16 %v1190, %v1186
          %v1279 = vpack.c.b16 %v1191, %v1187
          %v1280 = vpack.c.b16 %v1192, %v1188
          %v1281 = vpack.c.b16 %v1197, %v1193
          %v1282 = vpack.c.b16 %v1198, %v1194
          %v1283 = vpack.c.b16 %v1199, %v1195
          %v1284 = vpack.c.b16 %v1200, %v1196
          %v1285 = vpack.c.b16 %v1205, %v1201
          %v1286 = vpack.c.b16 %v1206, %v1202
          %v1287 = vpack.c.b16 %v1207, %v1203
          %v1288 = vpack.c.b16 %v1208, %v1204
          %v1289 = vpack.c.b16 %v1213, %v1209
          %v1290 = vpack.c.b16 %v1214, %v1210
          %v1291 = vpack.c.b16 %v1215, %v1211
          %v1292 = vpack.c.b16 %v1216, %v1212
          %v1293 = vpack.c.b16 %v1221, %v1217
          %v1294 = vpack.c.b16 %v1222, %v1218
          %v1295 = vpack.c.b16 %v1223, %v1219
          %v1296 = vpack.c.b16 %v1224, %v1220
          %v1297 = vpack.c.b16 %v1229, %v1225
          %v1298 = vpack.c.b16 %v1230, %v1226
          %v1299 = vpack.c.b16 %v1231, %v1227
          %v1300 = vpack.c.b16 %v1232, %v1228
          %v1301 = vpack.c.b16 %v1237, %v1233
          %v1302 = vpack.c.b16 %v1238, %v1234
          %v1303 = vpack.c.b16 %v1239, %v1235
          %v1304 = vpack.c.b16 %v1240, %v1236
          %1369 = vmatpush.bf16.msra.mxu0 %v1269
          %1370 = vmatpush.bf16.msra.mxu0 %v1265
          %1371 = vmatpush.bf16.msra.mxu0 %v1261
          %1372 = vmatpush.bf16.msra.mxu0 %v1257
          %1373 = vmatpush.bf16.msra.mxu0 %v1253
          %1374 = vmatpush.bf16.msra.mxu0 %v1249
          %1375 = vmatpush.bf16.msra.mxu0 %v1245
          %1376 = vmatpush.bf16.msra.mxu0 %v1241
          %1377 = vmatmul.bf16.gmra.mxu0 %v973
          %v1378 = vpop.f32.mrf.mxu0
          %v1379 = vadd.f32 %v1041, %v1378
          %v1380 = vpop.f32.mrf.mxu0
          %1381 = vdwg.mxu0
          %1382 = vmatpush.bf16.msra.mxu0 %v1301
          %1383 = vmatpush.bf16.msra.mxu0 %v1297
          %1384 = vmatpush.bf16.msra.mxu0 %v1293
          %1385 = vmatpush.bf16.msra.mxu0 %v1289
          %1386 = vmatpush.bf16.msra.mxu0 %v1285
          %1387 = vmatpush.bf16.msra.mxu0 %v1281
          %1388 = vmatpush.bf16.msra.mxu0 %v1277
          %1389 = vmatpush.bf16.msra.mxu0 %v1273
          %1390 = vmatmul.bf16.gmra.mxu0 %v974
          %v1391 = vpop.f32.mrf.mxu0
          %v1392 = vadd.f32 %v1379, %v1391
          %v1393 = vpop.f32.mrf.mxu0
          %1394 = vdwg.mxu0
          %1395 = vmatpush.bf16.msra.mxu0 %v1270
          %1396 = vmatpush.bf16.msra.mxu0 %v1266
          %1397 = vmatpush.bf16.msra.mxu0 %v1262
          %1398 = vmatpush.bf16.msra.mxu0 %v1258
          %1399 = vmatpush.bf16.msra.mxu0 %v1254
          %1400 = vmatpush.bf16.msra.mxu0 %v1250
          %1401 = vmatpush.bf16.msra.mxu0 %v1246
          %1402 = vmatpush.bf16.msra.mxu0 %v1242
          %1403 = vmatmul.bf16.gmra.mxu0 %v973
          %v1404 = vpop.f32.mrf.mxu0
          %v1405 = vadd.f32 %v1042, %v1404
          %v1406 = vpop.f32.mrf.mxu0
          %1407 = vdwg.mxu0
          %1408 = vmatpush.bf16.msra.mxu0 %v1302
          %1409 = vmatpush.bf16.msra.mxu0 %v1298
          %1410 = vmatpush.bf16.msra.mxu0 %v1294
          %1411 = vmatpush.bf16.msra.mxu0 %v1290
          %1412 = vmatpush.bf16.msra.mxu0 %v1286
          %1413 = vmatpush.bf16.msra.mxu0 %v1282
          %1414 = vmatpush.bf16.msra.mxu0 %v1278
          %1415 = vmatpush.bf16.msra.mxu0 %v1274
          %1416 = vmatmul.bf16.gmra.mxu0 %v974
          %v1417 = vpop.f32.mrf.mxu0
          %v1418 = vadd.f32 %v1405, %v1417
          %v1419 = vpop.f32.mrf.mxu0
          %1420 = vdwg.mxu0
          %1421 = vmatpush.bf16.msra.mxu0 %v1271
          %1422 = vmatpush.bf16.msra.mxu0 %v1267
          %1423 = vmatpush.bf16.msra.mxu0 %v1263
          %1424 = vmatpush.bf16.msra.mxu0 %v1259
          %1425 = vmatpush.bf16.msra.mxu0 %v1255
          %1426 = vmatpush.bf16.msra.mxu0 %v1251
          %1427 = vmatpush.bf16.msra.mxu0 %v1247
          %1428 = vmatpush.bf16.msra.mxu0 %v1243
          %1429 = vmatmul.bf16.gmra.mxu0 %v973
          %v1430 = vpop.f32.mrf.mxu0
          %v1431 = vadd.f32 %v1043, %v1430
          %v1432 = vpop.f32.mrf.mxu0
          %1433 = vdwg.mxu0
          %1434 = vmatpush.bf16.msra.mxu0 %v1303
          %1435 = vmatpush.bf16.msra.mxu0 %v1299
          %1436 = vmatpush.bf16.msra.mxu0 %v1295
          %1437 = vmatpush.bf16.msra.mxu0 %v1291
          %1438 = vmatpush.bf16.msra.mxu0 %v1287
          %1439 = vmatpush.bf16.msra.mxu0 %v1283
          %1440 = vmatpush.bf16.msra.mxu0 %v1279
          %1441 = vmatpush.bf16.msra.mxu0 %v1275
          %1442 = vmatmul.bf16.gmra.mxu0 %v974
          %v1443 = vpop.f32.mrf.mxu0
          %v1444 = vadd.f32 %v1431, %v1443
          %v1445 = vpop.f32.mrf.mxu0
          %1446 = vdwg.mxu0
          %1447 = vmatpush.bf16.msra.mxu0 %v1272
          %1448 = vmatpush.bf16.msra.mxu0 %v1268
          %1449 = vmatpush.bf16.msra.mxu0 %v1264
          %1450 = vmatpush.bf16.msra.mxu0 %v1260
          %1451 = vmatpush.bf16.msra.mxu0 %v1256
          %1452 = vmatpush.bf16.msra.mxu0 %v1252
          %1453 = vmatpush.bf16.msra.mxu0 %v1248
          %1454 = vmatpush.bf16.msra.mxu0 %v1244
          %1455 = vmatmul.bf16.gmra.mxu0 %v973
          %v1456 = vpop.f32.mrf.mxu0
          %v1457 = vadd.f32 %v1044, %v1456
          %v1458 = vpop.f32.mrf.mxu0
          %1459 = vdwg.mxu0
          %1460 = vmatpush.bf16.msra.mxu0 %v1304
          %1461 = vmatpush.bf16.msra.mxu0 %v1300
          %1462 = vmatpush.bf16.msra.mxu0 %v1296
          %1463 = vmatpush.bf16.msra.mxu0 %v1292
          %1464 = vmatpush.bf16.msra.mxu0 %v1288
          %1465 = vmatpush.bf16.msra.mxu0 %v1284
          %1466 = vmatpush.bf16.msra.mxu0 %v1280
          %1467 = vmatpush.bf16.msra.mxu0 %v1276
          %1468 = vmatmul.bf16.gmra.mxu0 %v974
          %v1469 = vpop.f32.mrf.mxu0
          %v1470 = vadd.f32 %v1457, %v1469
          %v1471 = vpop.f32.mrf.mxu0
          %1472 = vdwg.mxu0
          %1473 = vst [vmem:[#allocation15] sm:$0xff] %v1392
          %1474 = vst [vmem:[#allocation15 + $0x8] sm:$0xff] %v1418
          %1475 = vst [vmem:[#allocation15 + $0x10] sm:$0xff] %v1444
          %1476 = vst [vmem:[#allocation15 + $0x18] sm:$0xff] %v1470
        $region80: #{tpu_custom_call.1} parent=51 // pred_fallthru
          _
        %v1477 = vld [vmem:[#allocation2] sm:$0xff]
        %v1478 = vld [vmem:[#allocation2 + $0x8] sm:$0xff]
        %v1479 = vld [vmem:[#allocation2 + $0x10] sm:$0xff]
        %v1480 = vld [vmem:[#allocation2 + $0x18] sm:$0xff]
        %v1481 = vld [vmem:[%s376] sm:$0xf]
        %v1482 = vld [vmem:[%s386] sm:$0xff]
        %v1483 = vld [vmem:[%s386 + $0x8] sm:$0xff]
        %v1484 = vld [vmem:[%s386 + $0x10] sm:$0xff]
        %v1485 = vld [vmem:[%s386 + $0x18] sm:$0xff]
        %v1486 = vld [vmem:[%s386 + $0x20] sm:$0xff]
        %v1487 = vld [vmem:[%s386 + $0x28] sm:$0xff]
        %v1488 = vld [vmem:[%s386 + $0x30] sm:$0xff]
        %v1489 = vld [vmem:[%s386 + $0x38] sm:$0xff]
        %v1490 = vld [vmem:[%s386 + $0x40] sm:$0xff]
        %v1491 = vld [vmem:[%s386 + $0x48] sm:$0xff]
        %v1492 = vld [vmem:[%s386 + $0x50] sm:$0xff]
        %v1493 = vld [vmem:[%s386 + $0x58] sm:$0xff]
        %v1494 = vld [vmem:[%s386 + $0x60] sm:$0xff]
        %v1495 = vld [vmem:[%s386 + $0x68] sm:$0xff]
        %v1496 = vld [vmem:[%s386 + $0x70] sm:$0xff]
        %v1497 = vld [vmem:[%s386 + $0x78] sm:$0xff]
        %v1498 = vld [vmem:[%s386 + $0x80] sm:$0xff]
        %v1499 = vld [vmem:[%s386 + $0x88] sm:$0xff]
        %v1500 = vld [vmem:[%s386 + $0x90] sm:$0xff]
        %v1501 = vld [vmem:[%s386 + $0x98] sm:$0xff]
        %v1502 = vld [vmem:[%s386 + $0xa0] sm:$0xff]
        %v1503 = vld [vmem:[%s386 + $0xa8] sm:$0xff]
        %v1504 = vld [vmem:[%s386 + $0xb0] sm:$0xff]
        %v1505 = vld [vmem:[%s386 + $0xb8] sm:$0xff]
        %v1506 = vld [vmem:[%s386 + $0xc0] sm:$0xff]
        %v1507 = vld [vmem:[%s386 + $0xc8] sm:$0xff]
        %v1508 = vld [vmem:[%s386 + $0xd0] sm:$0xff]
        %v1509 = vld [vmem:[%s386 + $0xd8] sm:$0xff]
        %v1510 = vld [vmem:[%s386 + $0xe0] sm:$0xff]
        %v1511 = vld [vmem:[%s386 + $0xe8] sm:$0xff]
        %v1512 = vld [vmem:[%s386 + $0xf0] sm:$0xff]
        %v1513 = vld [vmem:[%s386 + $0xf8] sm:$0xff]
        %v1546 = vunpack.c.l.b16 %v1482
        %v1547 = vunpack.c.h.b16 %v1482
        %v1548 = vunpack.c.l.b16 %v1483
        %v1549 = vunpack.c.h.b16 %v1483
        %v1550 = vunpack.c.l.b16 %v1484
        %v1551 = vunpack.c.h.b16 %v1484
        %v1552 = vunpack.c.l.b16 %v1485
        %v1553 = vunpack.c.h.b16 %v1485
        %v1554 = vunpack.c.l.b16 %v1486
        %v1555 = vunpack.c.h.b16 %v1486
        %v1556 = vunpack.c.l.b16 %v1487
        %v1557 = vunpack.c.h.b16 %v1487
        %v1558 = vunpack.c.l.b16 %v1488
        %v1559 = vunpack.c.h.b16 %v1488
        %v1560 = vunpack.c.l.b16 %v1489
        %v1561 = vunpack.c.h.b16 %v1489
        %v1562 = vunpack.c.l.b16 %v1490
        %v1563 = vunpack.c.h.b16 %v1490
        %v1564 = vunpack.c.l.b16 %v1491
        %v1565 = vunpack.c.h.b16 %v1491
        %v1566 = vunpack.c.l.b16 %v1492
        %v1567 = vunpack.c.h.b16 %v1492
        %v1568 = vunpack.c.l.b16 %v1493
        %v1569 = vunpack.c.h.b16 %v1493
        %v1570 = vunpack.c.l.b16 %v1494
        %v1571 = vunpack.c.h.b16 %v1494
        %v1572 = vunpack.c.l.b16 %v1495
        %v1573 = vunpack.c.h.b16 %v1495
        %v1574 = vunpack.c.l.b16 %v1496
        %v1575 = vunpack.c.h.b16 %v1496
        %v1576 = vunpack.c.l.b16 %v1497
        %v1577 = vunpack.c.h.b16 %v1497
        %v1578 = vunpack.c.l.b16 %v1498
        %v1579 = vunpack.c.h.b16 %v1498
        %v1580 = vunpack.c.l.b16 %v1499
        %v1581 = vunpack.c.h.b16 %v1499
        %v1582 = vunpack.c.l.b16 %v1500
        %v1583 = vunpack.c.h.b16 %v1500
        %v1584 = vunpack.c.l.b16 %v1501
        %v1585 = vunpack.c.h.b16 %v1501
        %v1586 = vunpack.c.l.b16 %v1502
        %v1587 = vunpack.c.h.b16 %v1502
        %v1588 = vunpack.c.l.b16 %v1503
        %v1589 = vunpack.c.h.b16 %v1503
        %v1590 = vunpack.c.l.b16 %v1504
        %v1591 = vunpack.c.h.b16 %v1504
        %v1592 = vunpack.c.l.b16 %v1505
        %v1593 = vunpack.c.h.b16 %v1505
        %v1594 = vunpack.c.l.b16 %v1506
        %v1595 = vunpack.c.h.b16 %v1506
        %v1596 = vunpack.c.l.b16 %v1507
        %v1597 = vunpack.c.h.b16 %v1507
        %v1598 = vunpack.c.l.b16 %v1508
        %v1599 = vunpack.c.h.b16 %v1508
        %v1600 = vunpack.c.l.b16 %v1509
        %v1601 = vunpack.c.h.b16 %v1509
        %v1602 = vunpack.c.l.b16 %v1510
        %v1603 = vunpack.c.h.b16 %v1510
        %v1604 = vunpack.c.l.b16 %v1511
        %v1605 = vunpack.c.h.b16 %v1511
        %v1606 = vunpack.c.l.b16 %v1512
        %v1607 = vunpack.c.h.b16 %v1512
        %v1608 = vunpack.c.l.b16 %v1513
        %v1609 = vunpack.c.h.b16 %v1513
        %v1610 = vpack.c.b16 %v1550, %v1546
        %v1611 = vpack.c.b16 %v1551, %v1547
        %v1612 = vpack.c.b16 %v1552, %v1548
        %v1613 = vpack.c.b16 %v1553, %v1549
        %v1614 = vpack.c.b16 %v1558, %v1554
        %v1615 = vpack.c.b16 %v1559, %v1555
        %v1616 = vpack.c.b16 %v1560, %v1556
        %v1617 = vpack.c.b16 %v1561, %v1557
        %v1618 = vpack.c.b16 %v1566, %v1562
        %v1619 = vpack.c.b16 %v1567, %v1563
        %v1620 = vpack.c.b16 %v1568, %v1564
        %v1621 = vpack.c.b16 %v1569, %v1565
        %v1622 = vpack.c.b16 %v1574, %v1570
        %v1623 = vpack.c.b16 %v1575, %v1571
        %v1624 = vpack.c.b16 %v1576, %v1572
        %v1625 = vpack.c.b16 %v1577, %v1573
        %v1626 = vpack.c.b16 %v1582, %v1578
        %v1627 = vpack.c.b16 %v1583, %v1579
        %v1628 = vpack.c.b16 %v1584, %v1580
        %v1629 = vpack.c.b16 %v1585, %v1581
        %v1630 = vpack.c.b16 %v1590, %v1586
        %v1631 = vpack.c.b16 %v1591, %v1587
        %v1632 = vpack.c.b16 %v1592, %v1588
        %v1633 = vpack.c.b16 %v1593, %v1589
        %v1634 = vpack.c.b16 %v1598, %v1594
        %v1635 = vpack.c.b16 %v1599, %v1595
        %v1636 = vpack.c.b16 %v1600, %v1596
        %v1637 = vpack.c.b16 %v1601, %v1597
        %v1638 = vpack.c.b16 %v1606, %v1602
        %v1639 = vpack.c.b16 %v1607, %v1603
        %v1640 = vpack.c.b16 %v1608, %v1604
        %v1641 = vpack.c.b16 %v1609, %v1605
        %1674 = vmatpush.bf16.msra.mxu0 %v1638
        %1675 = vmatpush.bf16.msra.mxu0 %v1634
        %1676 = vmatpush.bf16.msra.mxu0 %v1630
        %1677 = vmatpush.bf16.msra.mxu0 %v1626
        %1678 = vmatpush.bf16.msra.mxu0 %v1622
        %1679 = vmatpush.bf16.msra.mxu0 %v1618
        %1680 = vmatpush.bf16.msra.mxu0 %v1614
        %1681 = vmatpush.bf16.msra.mxu0 %v1610
        %1682 = vmatmul.bf16.gmra.mxu0 %v1481
        %v1683 = vpop.f32.mrf.mxu0
        %v1684 = vadd.f32 0.0, %v1683
        %v1685 = vpop.f32.mrf.mxu0
        %1686 = vdwg.mxu0
        %1687 = vmatpush.bf16.msra.mxu0 %v1639
        %1688 = vmatpush.bf16.msra.mxu0 %v1635
        %1689 = vmatpush.bf16.msra.mxu0 %v1631
        %1690 = vmatpush.bf16.msra.mxu0 %v1627
        %1691 = vmatpush.bf16.msra.mxu0 %v1623
        %1692 = vmatpush.bf16.msra.mxu0 %v1619
        %1693 = vmatpush.bf16.msra.mxu0 %v1615
        %1694 = vmatpush.bf16.msra.mxu0 %v1611
        %1695 = vmatmul.bf16.gmra.mxu0 %v1481
        %v1696 = vpop.f32.mrf.mxu0
        %v1697 = vadd.f32 0.0, %v1696
        %v1698 = vpop.f32.mrf.mxu0
        %1699 = vdwg.mxu0
        %1700 = vmatpush.bf16.msra.mxu0 %v1640
        %1701 = vmatpush.bf16.msra.mxu0 %v1636
        %1702 = vmatpush.bf16.msra.mxu0 %v1632
        %1703 = vmatpush.bf16.msra.mxu0 %v1628
        %1704 = vmatpush.bf16.msra.mxu0 %v1624
        %1705 = vmatpush.bf16.msra.mxu0 %v1620
        %1706 = vmatpush.bf16.msra.mxu0 %v1616
        %1707 = vmatpush.bf16.msra.mxu0 %v1612
        %1708 = vmatmul.bf16.gmra.mxu0 %v1481
        %v1709 = vpop.f32.mrf.mxu0
        %v1710 = vadd.f32 0.0, %v1709
        %v1711 = vpop.f32.mrf.mxu0
        %1712 = vdwg.mxu0
        %1713 = vmatpush.bf16.msra.mxu0 %v1641
        %1714 = vmatpush.bf16.msra.mxu0 %v1637
        %1715 = vmatpush.bf16.msra.mxu0 %v1633
        %1716 = vmatpush.bf16.msra.mxu0 %v1629
        %1717 = vmatpush.bf16.msra.mxu0 %v1625
        %1718 = vmatpush.bf16.msra.mxu0 %v1621
        %1719 = vmatpush.bf16.msra.mxu0 %v1617
        %1720 = vmatpush.bf16.msra.mxu0 %v1613
        %1721 = vmatmul.bf16.gmra.mxu0 %v1481
        %v1722 = vpop.f32.mrf.mxu0
        %v1723 = vadd.f32 0.0, %v1722
        %v1724 = vpop.f32.mrf.mxu0
        %1725 = vdwg.mxu0
        %v1726 = vadd.f32 %v1477, %v1684
        %v1727 = vadd.f32 %v1478, %v1697
        %v1728 = vadd.f32 %v1479, %v1710
        %v1729 = vadd.f32 %v1480, %v1723
        %1730 = vst [vmem:[#allocation2] sm:$0xff] %v1726
        %1731 = vst [vmem:[#allocation2 + $0x8] sm:$0xff] %v1727
        %1732 = vst [vmem:[#allocation2 + $0x10] sm:$0xff] %v1728
        %1733 = vst [vmem:[#allocation2 + $0x18] sm:$0xff] %v1729
        %p1734 = scmp.eq.s32.totalorder %s31, 2
        // Predicated region
        $region81: #{tpu_custom_call.1} parent=51 // pred_check
          %p1735 = pneg %p1734
        $region82: #{tpu_custom_call.1} parent=51 // pred_check_branch
          %1737 = sbr.rel (%p1735) target = $region84
        $region83: #{tpu_custom_call.1} parent=51 // pred_region
          %v1738 = vld [vmem:[#allocation2] sm:$0xff]
          %v1739 = vld [vmem:[#allocation2 + $0x8] sm:$0xff]
          %v1740 = vld [vmem:[#allocation2 + $0x10] sm:$0xff]
          %v1741 = vld [vmem:[#allocation2 + $0x18] sm:$0xff]
          %1742 = vst [vmem:[#allocation14] sm:$0xff] %v1738
          %1743 = vst [vmem:[#allocation14 + $0x8] sm:$0xff] %v1739
          %1744 = vst [vmem:[#allocation14 + $0x10] sm:$0xff] %v1740
          %1745 = vst [vmem:[#allocation14 + $0x18] sm:$0xff] %v1741
        $region84: #{tpu_custom_call.1} parent=51 // pred_fallthru
          _
        // Predicated region
        $region85: #{tpu_custom_call.1} parent=51 // pred_check
          %p1746 = pneg %p222
        $region86: #{tpu_custom_call.1} parent=51 // pred_check_branch
          %1748 = sbr.rel (%p1746) target = $region88
        $region87: #{tpu_custom_call.1} parent=51 // pred_region
          %1750 = vsyncadd [#allocation5], 0
          %s1752 = sshll.u32 [#allocation14], 4
          %s1753 = int_to_ptr.vmem [resolvable:$true] %s1752
          %s1754 = sshll.u32 %s8, 4
          %s1755 = int_to_ptr.hbm [resolvable:$true] %s1754
          %1757 = dma.vmem_to_hbm [thread:$0]  %s1753, 512, %s1755, [#allocation5]
        $region88: #{tpu_custom_call.1} parent=51 // pred_fallthru
          _
        // Predicated region
        $region89: #{tpu_custom_call.1} parent=51 // pred_check
          %p1758 = pneg %p243
        $region90: #{tpu_custom_call.1} parent=51 // pred_check_branch
          %1760 = sbr.rel (%p1758) target = $region92
        $region91: #{tpu_custom_call.1} parent=51 // pred_region
          %1762 = vsyncadd [#allocation16], 0
          %s1764 = sshll.u32 [#allocation15], 4
          %s1765 = int_to_ptr.vmem [resolvable:$true] %s1764
          %s1766 = sshll.u32 %s9, 4
          %s1767 = int_to_ptr.hbm [resolvable:$true] %s1766
          %1769 = dma.vmem_to_hbm [thread:$0]  %s1765, 512, %s1767, [#allocation16]
        $region92: #{tpu_custom_call.1} parent=51 // pred_fallthru
          _
        // Predicated region
        $region93: #{tpu_custom_call.1} parent=51 // pred_check
          %p1770 = pneg %p222
        $region94: #{tpu_custom_call.1} parent=51 // pred_check_branch
          %1772 = sbr.rel (%p1770) target = $region96
        $region95: #{tpu_custom_call.1} parent=51 // pred_region
          %1774 = dma.done [#allocation5], 512
        $region96: #{tpu_custom_call.1} parent=51 // pred_fallthru
          _
        // Predicated region
        $region97: #{tpu_custom_call.1} parent=51 // pred_check
          %p1775 = pneg %p243
        $region98: #{tpu_custom_call.1} parent=51 // pred_check_branch
          %1777 = sbr.rel (%p1775) target = $region100
        $region99: #{tpu_custom_call.1} parent=51 // pred_region
          %1779 = dma.done [#allocation16], 512
        $region100: #{tpu_custom_call.1} parent=51 // pred_fallthru
          _
      $region52: #{tpu_custom_call.1} parent=5 // pred_fallthru
        _
      %p1780 = scmp.le.s32.totalorder 2, %s26
      // Predicated region
      $region101: #{tpu_custom_call.1} parent=5 // pred_check
        %p1781 = pneg %p1780
      $region102: #{tpu_custom_call.1} parent=5 // pred_check_branch
        %1783 = sbr.rel (%p1781) target = $region104
      $region103: #{tpu_custom_call.1} parent=5 // pred_region
        %s1784 = ssub.s32 %s26, 2
      $region104: #{tpu_custom_call.1} parent=5 // pred_fallthru
        _
    $region6: #{tpu_custom_call.1} parent=1 // loop_footer
      %s30 = sadd.s32 1, %s26
    $region7: #{tpu_custom_call.1} parent=1 // loop_footer_branch
      %25 = sbr.rel target = $region3
    $region8: #{tpu_custom_call.1} parent=1 // loop_exit
      _
    %1785 = vsyncpa [#allocation4], 1
    %s1786 = scalar_lea.sflag [#allocation4], 1
    %1787 = vsyncpa %s1786, 1
    %1788 = vsyncpa [#allocation7], 1
    %s1789 = scalar_lea.sflag [#allocation7], 1
    %1790 = vsyncpa %s1789, 1
    %1791 = vsyncpa [#allocation10], 1
    %1792 = vsyncpa [#allocation13], 1
    %1793 = vsyncpa [#allocation5], 1
    %s1794 = scalar_lea.sflag [#allocation5], 1
    %1795 = vsyncpa %s1794, 1
    %1796 = vsyncpa [#allocation16], 1

</llo_original>
